<compile_context>
chip_gen: v7x
topology: tpu7x:2x2x1
jax: 0.10.0
libtpu: 0.0.40
codegen_flags: <defaults>
</compile_context>

<pallas_src>
import functools

import jax
import jax.numpy as jnp
from jax.experimental import pallas as pl
from jax.experimental.pallas import tpu as pltpu

# ----------------------------- model config (small, T5-v1.1 style) ----------
B, S = 2, 8            # batch, max_length (sequence)
D_MODEL = 32           # d_model
NUM_HEADS = 4          # num_heads
D_KV = 8               # d_kv  (inner dim = NUM_HEADS * D_KV)
D_FF = 64              # d_ff  (gated-GELU FFN)
NUM_LAYERS = 2
VOCAB = 100
NUM_BUCKETS = 32
MAX_DISTANCE = 128
LN_EPS = 1e-6


# ----------------------------- in-kernel helpers ----------------------------
def _rms_norm(x, w, eps=LN_EPS):
    # T5 LayerNorm: no mean subtraction, no bias.
    var = jnp.mean(x * x, axis=-1, keepdims=True)
    return x * jax.lax.rsqrt(var + eps) * w


def _gelu_new(x):
    # T5 v1.1 "gelu_new" (tanh approximation).
    return 0.5 * x * (1.0 + jnp.tanh(0.7978845608028654 * (x + 0.044715 * x * x * x)))


# ----------------------------- fused encoder kernel -------------------------
def t5_encoder_kernel(x_ref, bias_ref, ln1_ref, wqkv_ref, wo_ref, ln2_ref,
                      wi01_ref, wof_ref, lnf_ref, y_ref, res_ref,
                      *, num_heads, d_kv, d_ff):
    """One T5 encoder block per grid step; residual stream resident in VMEM scratch."""
    layer = pl.program_id(0)
    n, d_model = res_ref.shape                               # n = B*S rows, d_model lanes

    @pl.when(layer == 0)
    def _init_residual():
        res_ref[...] = x_ref[...]

    x = res_ref[...]                                         # (n, D)

    # ---- self-attention sublayer (pre-RMSNorm; T5 has no 1/sqrt(dk) scale) --
    h = _rms_norm(x, ln1_ref[...])                           # (n, D)
    hb = jnp.broadcast_to(h[None], (num_heads, n, d_model))  # (H, n, D)
    qkv = jnp.einsum("hnd,hde->hne", hb, wqkv_ref[...],
                     preferred_element_type=jnp.float32)     # (H, n, 3*dk)
    q = qkv[:, :, :d_kv]
    k = qkv[:, :, d_kv:2 * d_kv]
    v = qkv[:, :, 2 * d_kv:]

    scores = jnp.einsum("hqd,hkd->hqk", q, k,
                        preferred_element_type=jnp.float32)  # (H, n, n)
    scores = scores + bias_ref[...]                          # rel-pos bias + pad/block mask
    m = jnp.max(scores, axis=-1, keepdims=True)
    p = jnp.exp(scores - m)
    p = p * pl.reciprocal(jnp.sum(p, axis=-1, keepdims=True), approx=True)
    ctx = jnp.einsum("hqk,hkd->hqd", p, v,
                     preferred_element_type=jnp.float32)     # (H, n, dk)
    per_head = jnp.einsum("hnd,hdm->hnm", ctx, wo_ref[...],
                          preferred_element_type=jnp.float32)  # (H, n, D)
    x1 = x + jnp.sum(per_head, axis=0)

    # ---- gated-GELU FFN sublayer --------------------------------------------
    h2 = _rms_norm(x1, ln2_ref[...])
    wi = jnp.dot(h2, wi01_ref[...], preferred_element_type=jnp.float32)   # (n, 2*F)
    ff_in = _gelu_new(wi[:, :d_ff]) * wi[:, d_ff:]
    x2 = x1 + jnp.dot(ff_in, wof_ref[...], preferred_element_type=jnp.float32)

    res_ref[...] = x2

    # Final RMSNorm fused into the last layer iteration; single HBM writeback.
    @pl.when(layer == pl.num_programs(0) - 1)
    def _final_norm():
        y_ref[...] = _rms_norm(x2, lnf_ref[...])


# ----------------------------- pallas_call wrapper ---------------------------
def run_encoder(x, bias, packed):
    N, D = x.shape
    L = packed["wqkv"].shape[0]
    H, dk, F = NUM_HEADS, D_KV, D_FF
    kernel = functools.partial(t5_encoder_kernel, num_heads=H, d_kv=dk, d_ff=F)
    return pl.pallas_call(
        kernel,
        out_shape=jax.ShapeDtypeStruct((N, D), jnp.float32),
        grid=(L,),
        in_specs=[
            pl.BlockSpec((N, D), lambda l: (0, 0)),                      # x (used at layer 0)
            pl.BlockSpec((H, N, N), lambda l: (0, 0, 0)),                # attention bias (+masks)
            pl.BlockSpec((None, 1, D), lambda l: (l, 0, 0)),             # ln1
            pl.BlockSpec((None, H, D, 3 * dk), lambda l: (l, 0, 0, 0)),  # W_q|W_k|W_v per head
            pl.BlockSpec((None, H, dk, D), lambda l: (l, 0, 0, 0)),      # W_o per head
            pl.BlockSpec((None, 1, D), lambda l: (l, 0, 0)),             # ln2
            pl.BlockSpec((None, D, 2 * F), lambda l: (l, 0, 0)),         # [W_i0 | W_i1]
            pl.BlockSpec((None, F, D), lambda l: (l, 0, 0)),             # W_o_ff
            pl.BlockSpec((None, 1, D), lambda l: (0, 0, 0)),             # final layer norm
        ],
        out_specs=pl.BlockSpec((N, D), lambda l: (0, 0)),
        scratch_shapes=[pltpu.VMEM((N, D), jnp.float32)],                # residual stream
        compiler_params=pltpu.CompilerParams(dimension_semantics=("arbitrary",)),
    )(x, bias, packed["ln1"], packed["wqkv"], packed["wo"], packed["ln2"],
      packed["wi01"], packed["wof"], packed["lnf"])


# ----------------------------- glue (plain JAX) ------------------------------
def _relative_position_bucket(relative_position, num_buckets=NUM_BUCKETS,
                              max_distance=MAX_DISTANCE):
    # bidirectional (encoder) bucketing, per HF T5.
    num_buckets //= 2
    relative_buckets = (relative_position > 0).astype(jnp.int32) * num_buckets
    relative_position = jnp.abs(relative_position)
    max_exact = num_buckets // 2
    is_small = relative_position < max_exact
    rp_f = jnp.maximum(relative_position, 1).astype(jnp.float32)
    val_if_large = max_exact + (
        jnp.log(rp_f / max_exact) / jnp.log(max_distance / max_exact)
        * (num_buckets - max_exact)
    ).astype(jnp.int32)
    val_if_large = jnp.minimum(val_if_large, num_buckets - 1)
    return relative_buckets + jnp.where(is_small, relative_position, val_if_large)


def build_attention_bias(rel_emb, mask):
    """(H, B*S, B*S): rel-pos bias + key-padding mask + block-diagonal (per-seq) mask."""
    Bn, Sn = mask.shape
    ctx = jnp.arange(Sn)[:, None]
    mem = jnp.arange(Sn)[None, :]
    buckets = _relative_position_bucket(mem - ctx)              # (S, S)
    pos_bias = jnp.transpose(rel_emb[buckets], (2, 0, 1))       # (H, S, S)
    # a key is attendable only if it is in the same sequence and not padding
    same = jnp.eye(Bn, dtype=jnp.float32)                       # (Bq, Bk)
    allowed = same[:, None, :, None] * mask[None, None, :, :]   # (Bq, 1, Bk, Sk)
    neg = (1.0 - allowed) * -1e9
    bias = pos_bias[:, None, :, None, :] + neg[None]            # (H, Bq, Sq, Bk, Sk)
    return bias.reshape(NUM_HEADS, Bn * Sn, Bn * Sn).astype(jnp.float32)


def pack_params(params):
    """Rearrange standard T5 weight layouts into the stacked kernel layout (free, once)."""
    D, H, dk = D_MODEL, NUM_HEADS, D_KV

    def per_head_in(w):      # (D, H*dk) -> (H, D, dk)
        return jnp.transpose(w.reshape(D, H, dk), (1, 0, 2))

    layers = params["layers"]
    return {
        "ln1": jnp.stack([lp["ln1"] for lp in layers]),                     # (L, 1, D)
        "ln2": jnp.stack([lp["ln2"] for lp in layers]),                     # (L, 1, D)
        "wqkv": jnp.stack([jnp.concatenate(
            [per_head_in(lp["wq"]), per_head_in(lp["wk"]), per_head_in(lp["wv"])],
            axis=-1) for lp in layers]),                                    # (L, H, D, 3*dk)
        "wo": jnp.stack([lp["wo"].reshape(H, dk, D) for lp in layers]),     # (L, H, dk, D)
        "wi01": jnp.stack([jnp.concatenate([lp["wi0"], lp["wi1"]], axis=-1)
                           for lp in layers]),                              # (L, D, 2*F)
        "wof": jnp.stack([lp["wof"] for lp in layers]),                     # (L, F, D)
        "lnf": params["ln_f"].reshape(1, 1, D),                             # (1, 1, D)
    }


def t5_encoder_forward(tokens, params):
    Bn, Sn = tokens.shape
    x = params["emb"][tokens].reshape(Bn * Sn, D_MODEL)       # (B*S, D) token embeddings
    mask = (tokens != 0).astype(jnp.float32)                  # pad id = 0
    bias = build_attention_bias(params["rel_emb"], mask)      # (H, B*S, B*S)
    packed = pack_params(params)
    y = run_encoder(x, bias, packed)                          # (B*S, D)
    return y.reshape(Bn, Sn, D_MODEL)                         # last_hidden_state


# ----------------------------- main ------------------------------------------
def make_params(key):
    n_layer_keys = 7 * NUM_LAYERS
    keys = jax.random.split(key, 3 + n_layer_keys)
    scale = 0.02
    params = {
        "emb": scale * jax.random.normal(keys[1], (VOCAB, D_MODEL), jnp.float32),
        "rel_emb": scale * jax.random.normal(keys[2], (NUM_BUCKETS, NUM_HEADS), jnp.float32),
        "ln_f": jnp.ones((1, D_MODEL), jnp.float32),
        "layers": [],
    }
    inner = NUM_HEADS * D_KV
    for l in range(NUM_LAYERS):
        k = keys[3 + 7 * l: 3 + 7 * (l + 1)]
        params["layers"].append({
            "ln1": jnp.ones((1, D_MODEL), jnp.float32),
            "wq": scale * jax.random.normal(k[0], (D_MODEL, inner), jnp.float32),
            "wk": scale * jax.random.normal(k[1], (D_MODEL, inner), jnp.float32),
            "wv": scale * jax.random.normal(k[2], (D_MODEL, inner), jnp.float32),
            "wo": scale * jax.random.normal(k[3], (inner, D_MODEL), jnp.float32),
            "ln2": jnp.ones((1, D_MODEL), jnp.float32),
            "wi0": scale * jax.random.normal(k[4], (D_MODEL, D_FF), jnp.float32),
            "wi1": scale * jax.random.normal(k[5], (D_MODEL, D_FF), jnp.float32),
            "wof": scale * jax.random.normal(k[6], (D_FF, D_MODEL), jnp.float32),
        })
    return params


if __name__ == "__main__":
    root = jax.random.PRNGKey(0)
    k_tok, k_par = jax.random.split(root)
    tokens = jax.random.randint(k_tok, (B, S), 0, VOCAB, dtype=jnp.int32)
    params = make_params(k_par)

    z = t5_encoder_forward(tokens, params)   # last_hidden_state, (B, S, D)
    z = jax.block_until_ready(z)

    assert z.shape == (B, S, D_MODEL) and z.dtype == jnp.float32
    assert bool(jnp.all(jnp.isfinite(z)))
    print("KERNEL_OK")
</pallas_src>

<mosaic_0001>
module attributes {stable_mosaic.version = 11 : i64} {
  func.func @t5_encoder_kernel(%arg0: i32, %arg1: memref<16x32xf32, #tpu.memory_space<vmem>>, %arg2: memref<4x16x16xf32, #tpu.memory_space<vmem>>, %arg3: memref<1x1x32xf32, #tpu.memory_space<vmem>>, %arg4: memref<1x4x32x24xf32, #tpu.memory_space<vmem>>, %arg5: memref<1x4x8x32xf32, #tpu.memory_space<vmem>>, %arg6: memref<1x1x32xf32, #tpu.memory_space<vmem>>, %arg7: memref<1x32x128xf32, #tpu.memory_space<vmem>>, %arg8: memref<1x64x32xf32, #tpu.memory_space<vmem>>, %arg9: memref<1x1x32xf32, #tpu.memory_space<vmem>>, %arg10: memref<16x32xf32, #tpu.memory_space<vmem>>, %arg11: memref<16x32xf32, #tpu.memory_space<vmem>>) attributes {dimension_semantics = [#tpu.dimension_semantics<arbitrary>], iteration_bounds = array<i64: 2>, scalar_prefetch = 0 : i64, scratch_operands = 1 : i64, tpu.core_type = #tpu.core_type<tc>, window_params = [{pipeline_mode = #tpu.pipeline_mode<synchronous>, transform_indices = @transform_0, window_bounds = array<i64: 16, 32>}, {pipeline_mode = #tpu.pipeline_mode<synchronous>, transform_indices = @transform_1, window_bounds = array<i64: 4, 16, 16>}, {transform_indices = @transform_2, window_bounds = array<i64: 1, 1, 32>}, {transform_indices = @transform_3, window_bounds = array<i64: 1, 4, 32, 24>}, {transform_indices = @transform_4, window_bounds = array<i64: 1, 4, 8, 32>}, {transform_indices = @transform_5, window_bounds = array<i64: 1, 1, 32>}, {transform_indices = @transform_6, window_bounds = array<i64: 1, 32, 128>}, {transform_indices = @transform_7, window_bounds = array<i64: 1, 64, 32>}, {pipeline_mode = #tpu.pipeline_mode<synchronous>, transform_indices = @transform_8, window_bounds = array<i64: 1, 1, 32>}, {pipeline_mode = #tpu.pipeline_mode<synchronous>, transform_indices = @transform_9, window_bounds = array<i64: 16, 32>}]} {
    %c0_i32 = arith.constant 0 : i32
    %0 = arith.cmpi eq, %arg0, %c0_i32 : i32
    %1 = arith.extui %0 : i1 to i32
    %c0_i32_0 = arith.constant 0 : i32
    %2 = arith.cmpi ne, %1, %c0_i32_0 : i32
    scf.if %2 {
      %c0_46 = arith.constant 0 : index
      %c0_47 = arith.constant 0 : index
      %87 = vector.load %arg1[%c0_46, %c0_47] : memref<16x32xf32, #tpu.memory_space<vmem>>, vector<16x32xf32>
      %c0_48 = arith.constant 0 : index
      %c0_49 = arith.constant 0 : index
      %88 = vector.load %arg11[%c0_48, %c0_49] : memref<16x32xf32, #tpu.memory_space<vmem>>, vector<16x32xf32>
      tpu.vector_store %arg11[%c0_48, %c0_49], %87 {strides = array<i32>} : memref<16x32xf32, #tpu.memory_space<vmem>>, vector<16x32xf32>,
    } else {
    }
    %c0 = arith.constant 0 : index
    %c0_1 = arith.constant 0 : index
    %3 = vector.load %arg11[%c0, %c0_1] : memref<16x32xf32, #tpu.memory_space<vmem>>, vector<16x32xf32>
    %c0_2 = arith.constant 0 : index
    %c0_3 = arith.constant 0 : index
    %c0_4 = arith.constant 0 : index
    %4 = vector.load %arg3[%c0_2, %c0_3, %c0_4] : memref<1x1x32xf32, #tpu.memory_space<vmem>>, vector<1x1x32xf32>
    %5 = vector.shape_cast %4 : vector<1x1x32xf32> to vector<1x32xf32>
    %6 = arith.mulf %3, %3 : vector<16x32xf32>
    %cst = arith.constant dense<0.000000e+00> : vector<16xf32>
    %7 = vector.multi_reduction <add>, %6, %cst [1] : vector<16x32xf32> to vector<16xf32>
    %8 = vector.shape_cast %7 : vector<16xf32> to vector<16x1xf32>
    %cst_5 = arith.constant 3.200000e+01 : f32
    %9 = vector.broadcast %cst_5 : f32 to vector<16x1xf32>
    %10 = arith.divf %8, %9 : vector<16x1xf32>
    %cst_6 = arith.constant 9.99999997E-7 : f32
    %11 = vector.broadcast %cst_6 : f32 to vector<16x1xf32>
    %12 = arith.addf %10, %11 : vector<16x1xf32>
    %13 = math.rsqrt %12 : vector<16x1xf32>
    %14 = vector.broadcast %13 : vector<16x1xf32> to vector<16x32xf32>
    %15 = arith.mulf %3, %14 : vector<16x32xf32>
    %16 = vector.broadcast %5 : vector<1x32xf32> to vector<16x32xf32>
    %17 = arith.mulf %15, %16 : vector<16x32xf32>
    %18 = vector.shape_cast %17 : vector<16x32xf32> to vector<1x16x32xf32>
    %19 = vector.shape_cast %18 : vector<1x16x32xf32> to vector<1x16x32xf32>
    %20 = vector.broadcast %19 : vector<1x16x32xf32> to vector<4x16x32xf32>
    %c0_7 = arith.constant 0 : index
    %c0_8 = arith.constant 0 : index
    %c0_9 = arith.constant 0 : index
    %c0_10 = arith.constant 0 : index
    %21 = vector.load %arg4[%c0_7, %c0_8, %c0_9, %c0_10] : memref<1x4x32x24xf32, #tpu.memory_space<vmem>>, vector<1x4x32x24xf32>
    %22 = vector.shape_cast %21 : vector<1x4x32x24xf32> to vector<4x32x24xf32>
    "tpu.trace_start"() <{level = 10 : i32, message = "hnd,hde->hne"}> : () -> ()
    %cst_11 = arith.constant dense<0.000000e+00> : vector<4x16x24xf32>
    %23 = tpu.matmul %20, %22, %cst_11 {dimension_numbers = #tpu.dot_dimension_numbers<[2], [1], [1], [2], [0, 0, 0, 1, 1, 2], [0], [0]>} : vector<4x16x32xf32>, vector<4x32x24xf32>, vector<4x16x24xf32> -> vector<4x16x24xf32>
    "tpu.trace_stop"() : () -> ()
    %24 = vector.extract_strided_slice %23 {offsets = [0, 0, 0], sizes = [4, 16, 8], strides = [1, 1, 1]} : vector<4x16x24xf32> to vector<4x16x8xf32>
    %25 = vector.extract_strided_slice %23 {offsets = [0, 0, 8], sizes = [4, 16, 8], strides = [1, 1, 1]} : vector<4x16x24xf32> to vector<4x16x8xf32>
    %26 = vector.extract_strided_slice %23 {offsets = [0, 0, 16], sizes = [4, 16, 8], strides = [1, 1, 1]} : vector<4x16x24xf32> to vector<4x16x8xf32>
    "tpu.trace_start"() <{level = 10 : i32, message = "hqd,hkd->hqk"}> : () -> ()
    %cst_12 = arith.constant dense<0.000000e+00> : vector<4x16x16xf32>
    %27 = tpu.matmul %24, %25, %cst_12 {dimension_numbers = #tpu.dot_dimension_numbers<[2], [2], [1], [1], [0, 0, 0, 1, 1, 1], [0], [0]>} : vector<4x16x8xf32>, vector<4x16x8xf32>, vector<4x16x16xf32> -> vector<4x16x16xf32>
    "tpu.trace_stop"() : () -> ()
    %c0_13 = arith.constant 0 : index
    %c0_14 = arith.constant 0 : index
    %c0_15 = arith.constant 0 : index
    %28 = vector.load %arg2[%c0_13, %c0_14, %c0_15] : memref<4x16x16xf32, #tpu.memory_space<vmem>>, vector<4x16x16xf32>
    %29 = arith.addf %27, %28 : vector<4x16x16xf32>
    %cst_16 = arith.constant dense<0xFF800000> : vector<4x16xf32>
    %30 = vector.multi_reduction <maximumf>, %29, %cst_16 [2] : vector<4x16x16xf32> to vector<4x16xf32>
    %31 = vector.shape_cast %30 : vector<4x16xf32> to vector<4x16x1xf32>
    %32 = vector.broadcast %31 : vector<4x16x1xf32> to vector<4x16x16xf32>
    %33 = arith.subf %29, %32 : vector<4x16x16xf32>
    %34 = math.exp %33 : vector<4x16x16xf32>
    %cst_17 = arith.constant dense<0.000000e+00> : vector<4x16xf32>
    %35 = vector.multi_reduction <add>, %34, %cst_17 [2] : vector<4x16x16xf32> to vector<4x16xf32>
    %36 = vector.shape_cast %35 : vector<4x16xf32> to vector<4x16x1xf32>
    %37 = tpu.reciprocal %36 {approx = true} : vector<4x16x1xf32> -> vector<4x16x1xf32>
    %38 = vector.broadcast %37 : vector<4x16x1xf32> to vector<4x16x16xf32>
    %39 = arith.mulf %34, %38 : vector<4x16x16xf32>
    "tpu.trace_start"() <{level = 10 : i32, message = "hqk,hkd->hqd"}> : () -> ()
    %cst_18 = arith.constant dense<0.000000e+00> : vector<4x16x8xf32>
    %40 = tpu.matmul %39, %26, %cst_18 {dimension_numbers = #tpu.dot_dimension_numbers<[2], [1], [1], [2], [0, 0, 0, 1, 1, 2], [0], [0]>} : vector<4x16x16xf32>, vector<4x16x8xf32>, vector<4x16x8xf32> -> vector<4x16x8xf32>
    "tpu.trace_stop"() : () -> ()
    %c0_19 = arith.constant 0 : index
    %c0_20 = arith.constant 0 : index
    %c0_21 = arith.constant 0 : index
    %c0_22 = arith.constant 0 : index
    %41 = vector.load %arg5[%c0_19, %c0_20, %c0_21, %c0_22] : memref<1x4x8x32xf32, #tpu.memory_space<vmem>>, vector<1x4x8x32xf32>
    %42 = vector.shape_cast %41 : vector<1x4x8x32xf32> to vector<4x8x32xf32>
    "tpu.trace_start"() <{level = 10 : i32, message = "hnd,hdm->hnm"}> : () -> ()
    %cst_23 = arith.constant dense<0.000000e+00> : vector<4x16x32xf32>
    %43 = tpu.matmul %40, %42, %cst_23 {dimension_numbers = #tpu.dot_dimension_numbers<[2], [1], [1], [2], [0, 0, 0, 1, 1, 2], [0], [0]>} : vector<4x16x8xf32>, vector<4x8x32xf32>, vector<4x16x32xf32> -> vector<4x16x32xf32>
    "tpu.trace_stop"() : () -> ()
    %cst_24 = arith.constant dense<0.000000e+00> : vector<16x32xf32>
    %44 = vector.multi_reduction <add>, %43, %cst_24 [0] : vector<4x16x32xf32> to vector<16x32xf32>
    %45 = arith.addf %3, %44 : vector<16x32xf32>
    %c0_25 = arith.constant 0 : index
    %c0_26 = arith.constant 0 : index
    %c0_27 = arith.constant 0 : index
    %46 = vector.load %arg6[%c0_25, %c0_26, %c0_27] : memref<1x1x32xf32, #tpu.memory_space<vmem>>, vector<1x1x32xf32>
    %47 = vector.shape_cast %46 : vector<1x1x32xf32> to vector<1x32xf32>
    %48 = arith.mulf %45, %45 : vector<16x32xf32>
    %cst_28 = arith.constant dense<0.000000e+00> : vector<16xf32>
    %49 = vector.multi_reduction <add>, %48, %cst_28 [1] : vector<16x32xf32> to vector<16xf32>
    %50 = vector.shape_cast %49 : vector<16xf32> to vector<16x1xf32>
    %cst_29 = arith.constant 3.200000e+01 : f32
    %51 = vector.broadcast %cst_29 : f32 to vector<16x1xf32>
    %52 = arith.divf %50, %51 : vector<16x1xf32>
    %cst_30 = arith.constant 9.99999997E-7 : f32
    %53 = vector.broadcast %cst_30 : f32 to vector<16x1xf32>
    %54 = arith.addf %52, %53 : vector<16x1xf32>
    %55 = math.rsqrt %54 : vector<16x1xf32>
    %56 = vector.broadcast %55 : vector<16x1xf32> to vector<16x32xf32>
    %57 = arith.mulf %45, %56 : vector<16x32xf32>
    %58 = vector.broadcast %47 : vector<1x32xf32> to vector<16x32xf32>
    %59 = arith.mulf %57, %58 : vector<16x32xf32>
    %c0_31 = arith.constant 0 : index
    %c0_32 = arith.constant 0 : index
    %c0_33 = arith.constant 0 : index
    %60 = vector.load %arg7[%c0_31, %c0_32, %c0_33] : memref<1x32x128xf32, #tpu.memory_space<vmem>>, vector<1x32x128xf32>
    %61 = vector.shape_cast %60 : vector<1x32x128xf32> to vector<32x128xf32>
    %cst_34 = arith.constant dense<0.000000e+00> : vector<16x128xf32>
    %62 = tpu.matmul %59, %61, %cst_34 {dimension_numbers = #tpu.dot_dimension_numbers<[1], [0], [0], [1], [0, 0, 1, 1], [], []>} : vector<16x32xf32>, vector<32x128xf32>, vector<16x128xf32> -> vector<16x128xf32>
    %63 = vector.extract_strided_slice %62 {offsets = [0, 0], sizes = [16, 64], strides = [1, 1]} : vector<16x128xf32> to vector<16x64xf32>
    %cst_35 = arith.constant 5.000000e-01 : f32
    %64 = vector.broadcast %cst_35 : f32 to vector<16x64xf32>
    %65 = arith.mulf %64, %63 : vector<16x64xf32>
    %cst_36 = arith.constant 4.471500e-02 : f32
    %66 = vector.broadcast %cst_36 : f32 to vector<16x64xf32>
    %67 = arith.mulf %66, %63 : vector<16x64xf32>
    %68 = arith.mulf %67, %63 : vector<16x64xf32>
    %69 = arith.mulf %68, %63 : vector<16x64xf32>
    %70 = arith.addf %63, %69 : vector<16x64xf32>
    %cst_37 = arith.constant 0.797884583 : f32
    %71 = vector.broadcast %cst_37 : f32 to vector<16x64xf32>
    %72 = arith.mulf %71, %70 : vector<16x64xf32>
    %73 = math.tanh %72 : vector<16x64xf32>
    %cst_38 = arith.constant 1.000000e+00 : f32
    %74 = vector.broadcast %cst_38 : f32 to vector<16x64xf32>
    %75 = arith.addf %74, %73 : vector<16x64xf32>
    %76 = arith.mulf %65, %75 : vector<16x64xf32>
    %77 = vector.extract_strided_slice %62 {offsets = [0, 64], sizes = [16, 64], strides = [1, 1]} : vector<16x128xf32> to vector<16x64xf32>
    %78 = arith.mulf %76, %77 : vector<16x64xf32>
    %c0_39 = arith.constant 0 : index
    %c0_40 = arith.constant 0 : index
    %c0_41 = arith.constant 0 : index
    %79 = vector.load %arg8[%c0_39, %c0_40, %c0_41] : memref<1x64x32xf32, #tpu.memory_space<vmem>>, vector<1x64x32xf32>
    %80 = vector.shape_cast %79 : vector<1x64x32xf32> to vector<64x32xf32>
    %cst_42 = arith.constant dense<0.000000e+00> : vector<16x32xf32>
    %81 = tpu.matmul %78, %80, %cst_42 {dimension_numbers = #tpu.dot_dimension_numbers<[1], [0], [0], [1], [0, 0, 1, 1], [], []>} : vector<16x64xf32>, vector<64x32xf32>, vector<16x32xf32> -> vector<16x32xf32>
    %82 = arith.addf %45, %81 : vector<16x32xf32>
    %c0_43 = arith.constant 0 : index
    %c0_44 = arith.constant 0 : index
    %83 = vector.load %arg11[%c0_43, %c0_44] : memref<16x32xf32, #tpu.memory_space<vmem>>, vector<16x32xf32>
    tpu.vector_store %arg11[%c0_43, %c0_44], %82 {strides = array<i32>} : memref<16x32xf32, #tpu.memory_space<vmem>>, vector<16x32xf32>,
    %c1_i32 = arith.constant 1 : i32
    %84 = arith.cmpi eq, %arg0, %c1_i32 : i32
    %85 = arith.extui %84 : i1 to i32
    %c0_i32_45 = arith.constant 0 : i32
    %86 = arith.cmpi ne, %85, %c0_i32_45 : i32
    scf.if %86 {
      %c0_46 = arith.constant 0 : index
      %c0_47 = arith.constant 0 : index
      %c0_48 = arith.constant 0 : index
      %87 = vector.load %arg9[%c0_46, %c0_47, %c0_48] : memref<1x1x32xf32, #tpu.memory_space<vmem>>, vector<1x1x32xf32>
      %88 = vector.shape_cast %87 : vector<1x1x32xf32> to vector<1x32xf32>
      %89 = arith.mulf %82, %82 : vector<16x32xf32>
      %cst_49 = arith.constant dense<0.000000e+00> : vector<16xf32>
      %90 = vector.multi_reduction <add>, %89, %cst_49 [1] : vector<16x32xf32> to vector<16xf32>
      %91 = vector.shape_cast %90 : vector<16xf32> to vector<16x1xf32>
      %cst_50 = arith.constant 3.200000e+01 : f32
      %92 = vector.broadcast %cst_50 : f32 to vector<16x1xf32>
      %93 = arith.divf %91, %92 : vector<16x1xf32>
      %cst_51 = arith.constant 9.99999997E-7 : f32
      %94 = vector.broadcast %cst_51 : f32 to vector<16x1xf32>
      %95 = arith.addf %93, %94 : vector<16x1xf32>
      %96 = math.rsqrt %95 : vector<16x1xf32>
      %97 = vector.broadcast %96 : vector<16x1xf32> to vector<16x32xf32>
      %98 = arith.mulf %82, %97 : vector<16x32xf32>
      %99 = vector.broadcast %88 : vector<1x32xf32> to vector<16x32xf32>
      %100 = arith.mulf %98, %99 : vector<16x32xf32>
      %c0_52 = arith.constant 0 : index
      %c0_53 = arith.constant 0 : index
      %101 = vector.load %arg10[%c0_52, %c0_53] : memref<16x32xf32, #tpu.memory_space<vmem>>, vector<16x32xf32>
      tpu.vector_store %arg10[%c0_52, %c0_53], %100 {strides = array<i32>} : memref<16x32xf32, #tpu.memory_space<vmem>>, vector<16x32xf32>,
    } else {
    }
    return
  }
  func.func @transform_0(%arg0: i32) -> (i32, i32) {
    %c0_i32 = arith.constant 0 : i32
    %c0_i32_0 = arith.constant 0 : i32
    %c0_i32_1 = arith.constant 0 : i32
    return %c0_i32, %c0_i32_0 : i32, i32
  }
  func.func @transform_1(%arg0: i32) -> (i32, i32, i32) {
    %c0_i32 = arith.constant 0 : i32
    %c0_i32_0 = arith.constant 0 : i32
    %c0_i32_1 = arith.constant 0 : i32
    %c0_i32_2 = arith.constant 0 : i32
    return %c0_i32, %c0_i32_0, %c0_i32_1 : i32, i32, i32
  }
  func.func @transform_2(%arg0: i32) -> (i32, i32, i32) {
    %c0_i32 = arith.constant 0 : i32
    %c0_i32_0 = arith.constant 0 : i32
    %c0_i32_1 = arith.constant 0 : i32
    return %arg0, %c0_i32, %c0_i32_0 : i32, i32, i32
  }
  func.func @transform_3(%arg0: i32) -> (i32, i32, i32, i32) {
    %c0_i32 = arith.constant 0 : i32
    %c0_i32_0 = arith.constant 0 : i32
    %c0_i32_1 = arith.constant 0 : i32
    %c0_i32_2 = arith.constant 0 : i32
    return %arg0, %c0_i32, %c0_i32_0, %c0_i32_1 : i32, i32, i32, i32
  }
  func.func @transform_4(%arg0: i32) -> (i32, i32, i32, i32) {
    %c0_i32 = arith.constant 0 : i32
    %c0_i32_0 = arith.constant 0 : i32
    %c0_i32_1 = arith.constant 0 : i32
    %c0_i32_2 = arith.constant 0 : i32
    return %arg0, %c0_i32, %c0_i32_0, %c0_i32_1 : i32, i32, i32, i32
  }
  func.func @transform_5(%arg0: i32) -> (i32, i32, i32) {
    %c0_i32 = arith.constant 0 : i32
    %c0_i32_0 = arith.constant 0 : i32
    %c0_i32_1 = arith.constant 0 : i32
    return %arg0, %c0_i32, %c0_i32_0 : i32, i32, i32
  }
  func.func @transform_6(%arg0: i32) -> (i32, i32, i32) {
    %c0_i32 = arith.constant 0 : i32
    %c0_i32_0 = arith.constant 0 : i32
    %c0_i32_1 = arith.constant 0 : i32
    return %arg0, %c0_i32, %c0_i32_0 : i32, i32, i32
  }
  func.func @transform_7(%arg0: i32) -> (i32, i32, i32) {
    %c0_i32 = arith.constant 0 : i32
    %c0_i32_0 = arith.constant 0 : i32
    %c0_i32_1 = arith.constant 0 : i32
    return %arg0, %c0_i32, %c0_i32_0 : i32, i32, i32
  }
  func.func @transform_8(%arg0: i32) -> (i32, i32, i32) {
    %c0_i32 = arith.constant 0 : i32
    %c0_i32_0 = arith.constant 0 : i32
    %c0_i32_1 = arith.constant 0 : i32
    %c0_i32_2 = arith.constant 0 : i32
    return %c0_i32, %c0_i32_0, %c0_i32_1 : i32, i32, i32
  }
  func.func @transform_9(%arg0: i32) -> (i32, i32) {
    %c0_i32 = arith.constant 0 : i32
    %c0_i32_0 = arith.constant 0 : i32
    %c0_i32_1 = arith.constant 0 : i32
    return %c0_i32, %c0_i32_0 : i32, i32
  }
}

</mosaic_0001>

<llo_original>
// kernel: tpu_custom_call.1
$region0: #{tpu_custom_call.1}
  #allocation0 [shape = 'u32[]', space=smem, size = 0x4, offset = 0x4, fixed_abs, tag = 'smem constant byte address 0x4 - core index']
  #allocation1 [shape = 'u32[144,128]{1,0:T(1,128)}', space=vmem, size = 0x12000, scoped, tag = 'internal scratch']
  #allocation2 [shape = 'f32[16,32]{1,0:T(8,128)}', space=vmem, size = 0x2000, scoped, tag = 'scratch operand']
  %s0 = inlined_call_operand.vmem [shape: f32[16,32], index: 0, kind: input, shape index: {}]
  %s1 = inlined_call_operand.vmem [shape: f32[4,16,16], index: 1, kind: input, shape index: {}]
  %s2 = inlined_call_operand.vmem [shape: f32[2,1,32], index: 2, kind: input, shape index: {}]
  %s3 = inlined_call_operand.vmem [shape: f32[2,4,32,24], index: 3, kind: input, shape index: {}]
  %s4 = inlined_call_operand.vmem [shape: f32[2,4,8,32], index: 4, kind: input, shape index: {}]
  %s5 = inlined_call_operand.vmem [shape: f32[2,1,32], index: 5, kind: input, shape index: {}]
  %s6 = inlined_call_operand.vmem [shape: f32[2,32,128], index: 6, kind: input, shape index: {}]
  %s7 = inlined_call_operand.vmem [shape: f32[2,64,32], index: 7, kind: input, shape index: {}]
  %s8 = inlined_call_operand.vmem [shape: f32[1,1,32], index: 8, kind: input, shape index: {}]
  %s9 = inlined_call_operand.hbm [shape: f32[16,32], index: 9, kind: output, shape index: {}]
  %s10 = sld [smem:[#allocation0]]
  $region77: #{tpu_custom_call.1} parent=0
    _
  %s12 = ssub.s32 1, %s10
  %s13 = scalar_select 0, %s12, %s10
  $region1: #{tpu_custom_call.1} parent=0
    #allocation3 [shape = 'u8[8192]{0}', space=vmem, size = 0x2000, scoped, tag = 'output window, operand 0, single buffered']
    #allocation4 [shape = 's32[2]{0}', space=sflag, size = 0x8, scoped, tag = 'scoped memory for tpu_custom_call.1']
    %14 = vsyncpa [#allocation4], 0
    loop: start=0, step=1, limit=4
    $region2: #{tpu_custom_call.1} parent=1 // loop_pre_header
      _
    $region3: #{tpu_custom_call.1} parent=1 // loop_header
      %s16 = sphi 0, %s20
      %p17 = scmp.ge.s32.totalorder %s16, 4
      %s24 = sphi 0, %s24
      %s26 = sphi 0, %s24
      %s27 = sphi 0, %s26
      %s41 = sphi 0, %s27
      %s45 = sphi 0, %s45
      %s47 = sphi 0, %s45
      %s48 = sphi 0, %s47
      %s62 = sphi 0, %s48
      %s68 = sphi 0, %s70
      %s71 = sphi 0, %s68
      %s72 = sphi 0, %s71
      %s88 = sphi 0, %s72
      %s94 = sphi 0, %s96
      %s97 = sphi 0, %s94
      %s98 = sphi 0, %s97
      %s114 = sphi 0, %s98
      %s120 = sphi 0, %s122
      %s123 = sphi 0, %s120
      %s124 = sphi 0, %s123
      %s140 = sphi 0, %s124
      %s146 = sphi 0, %s148
      %s149 = sphi 0, %s146
      %s150 = sphi 0, %s149
      %s166 = sphi 0, %s150
      %s172 = sphi 0, %s174
      %s175 = sphi 0, %s172
      %s176 = sphi 0, %s175
      %s192 = sphi 0, %s176
      %s198 = sphi 0, %s200
      %s201 = sphi 0, %s198
      %s202 = sphi 0, %s201
      %s218 = sphi 0, %s202
      %s222 = sphi 0, %s222
      %s224 = sphi 0, %s222
      %s225 = sphi 0, %s224
      %s239 = sphi 0, %s225
      %s243 = sphi 0, %s243
      %s245 = sphi 0, %s243
      %s246 = sphi 0, %s245
      %s260 = sphi 0, %s246
    $region4: #{tpu_custom_call.1} parent=1 // loop_header_branch
      %19 = sbr.rel (%p17) target = $region8
    $region5: #{tpu_custom_call.1} parent=1 // loop_body
      %s21 = ssub.s32 %s16, 1
      %s22 = ssub.s32 %s16, 2
      %s23 = sadd.s32 %s16, 1
      %s25 = sadd.s32 %s24, 1
      %p28 = scmp.eq.s32.totalorder %s16, 1
      %p29 = scmp.ne.s32.totalorder %s24, %s26
      %p30 = scmp.eq.s32.totalorder %s16, 0
      %p31 = por %p29, %p30
      %p32 = scmp.ne.s32.totalorder %s24, %s26
      %p33 = scmp.eq.s32.totalorder %s21, 1
      %p34 = por %p32, %p33
      %p35 = scmp.ne.s32.totalorder %s26, %s27
      %p36 = scmp.eq.s32.totalorder %s21, 0
      %p37 = por %p35, %p36
      %p38 = scmp.ne.s32.totalorder %s26, %s27
      %p39 = scmp.eq.s32.totalorder %s22, 1
      %p40 = por %p38, %p39
      %p42 = scmp.ne.s32.totalorder %s27, %s41
      %p43 = scmp.eq.s32.totalorder %s22, 0
      %p44 = por %p42, %p43
      %s46 = sadd.s32 %s45, 1
      %p49 = scmp.eq.s32.totalorder %s16, 1
      %p50 = scmp.ne.s32.totalorder %s45, %s47
      %p51 = scmp.eq.s32.totalorder %s16, 0
      %p52 = por %p50, %p51
      %p53 = scmp.ne.s32.totalorder %s45, %s47
      %p54 = scmp.eq.s32.totalorder %s21, 1
      %p55 = por %p53, %p54
      %p56 = scmp.ne.s32.totalorder %s47, %s48
      %p57 = scmp.eq.s32.totalorder %s21, 0
      %p58 = por %p56, %p57
      %p59 = scmp.ne.s32.totalorder %s47, %s48
      %p60 = scmp.eq.s32.totalorder %s22, 1
      %p61 = por %p59, %p60
      %p63 = scmp.ne.s32.totalorder %s48, %s62
      %p64 = scmp.eq.s32.totalorder %s22, 0
      %p65 = por %p63, %p64
      %s66 = ssub.s32 %s16, %s23
      %p67 = scmp.eq.s32.totalorder %s66, 0
      %s69 = sadd.s32 %s68, 1
      %s70 = scalar_select %p67, %s68, %s69
      %p73 = pneg %p67
      %p74 = scmp.eq.s32.totalorder %s16, 1
      %p75 = por %p73, %p74
      %p76 = scmp.ne.s32.totalorder %s68, %s71
      %p77 = scmp.eq.s32.totalorder %s16, 0
      %p78 = por %p76, %p77
      %p79 = scmp.ne.s32.totalorder %s68, %s71
      %p80 = scmp.eq.s32.totalorder %s21, 1
      %p81 = por %p79, %p80
      %p82 = scmp.ne.s32.totalorder %s71, %s72
      %p83 = scmp.eq.s32.totalorder %s21, 0
      %p84 = por %p82, %p83
      %p85 = scmp.ne.s32.totalorder %s71, %s72
      %p86 = scmp.eq.s32.totalorder %s22, 1
      %p87 = por %p85, %p86
      %p89 = scmp.ne.s32.totalorder %s72, %s88
      %p90 = scmp.eq.s32.totalorder %s22, 0
      %p91 = por %p89, %p90
      %s92 = ssub.s32 %s16, %s23
      %p93 = scmp.eq.s32.totalorder %s92, 0
      %s95 = sadd.s32 %s94, 1
      %s96 = scalar_select %p93, %s94, %s95
      %p99 = pneg %p93
      %p100 = scmp.eq.s32.totalorder %s16, 1
      %p101 = por %p99, %p100
      %p102 = scmp.ne.s32.totalorder %s94, %s97
      %p103 = scmp.eq.s32.totalorder %s16, 0
      %p104 = por %p102, %p103
      %p105 = scmp.ne.s32.totalorder %s94, %s97
      %p106 = scmp.eq.s32.totalorder %s21, 1
      %p107 = por %p105, %p106
      %p108 = scmp.ne.s32.totalorder %s97, %s98
      %p109 = scmp.eq.s32.totalorder %s21, 0
      %p110 = por %p108, %p109
      %p111 = scmp.ne.s32.totalorder %s97, %s98
      %p112 = scmp.eq.s32.totalorder %s22, 1
      %p113 = por %p111, %p112
      %p115 = scmp.ne.s32.totalorder %s98, %s114
      %p116 = scmp.eq.s32.totalorder %s22, 0
      %p117 = por %p115, %p116
      %s118 = ssub.s32 %s16, %s23
      %p119 = scmp.eq.s32.totalorder %s118, 0
      %s121 = sadd.s32 %s120, 1
      %s122 = scalar_select %p119, %s120, %s121
      %p125 = pneg %p119
      %p126 = scmp.eq.s32.totalorder %s16, 1
      %p127 = por %p125, %p126
      %p128 = scmp.ne.s32.totalorder %s120, %s123
      %p129 = scmp.eq.s32.totalorder %s16, 0
      %p130 = por %p128, %p129
      %p131 = scmp.ne.s32.totalorder %s120, %s123
      %p132 = scmp.eq.s32.totalorder %s21, 1
      %p133 = por %p131, %p132
      %p134 = scmp.ne.s32.totalorder %s123, %s124
      %p135 = scmp.eq.s32.totalorder %s21, 0
      %p136 = por %p134, %p135
      %p137 = scmp.ne.s32.totalorder %s123, %s124
      %p138 = scmp.eq.s32.totalorder %s22, 1
      %p139 = por %p137, %p138
      %p141 = scmp.ne.s32.totalorder %s124, %s140
      %p142 = scmp.eq.s32.totalorder %s22, 0
      %p143 = por %p141, %p142
      %s144 = ssub.s32 %s16, %s23
      %p145 = scmp.eq.s32.totalorder %s144, 0
      %s147 = sadd.s32 %s146, 1
      %s148 = scalar_select %p145, %s146, %s147
      %p151 = pneg %p145
      %p152 = scmp.eq.s32.totalorder %s16, 1
      %p153 = por %p151, %p152
      %p154 = scmp.ne.s32.totalorder %s146, %s149
      %p155 = scmp.eq.s32.totalorder %s16, 0
      %p156 = por %p154, %p155
      %p157 = scmp.ne.s32.totalorder %s146, %s149
      %p158 = scmp.eq.s32.totalorder %s21, 1
      %p159 = por %p157, %p158
      %p160 = scmp.ne.s32.totalorder %s149, %s150
      %p161 = scmp.eq.s32.totalorder %s21, 0
      %p162 = por %p160, %p161
      %p163 = scmp.ne.s32.totalorder %s149, %s150
      %p164 = scmp.eq.s32.totalorder %s22, 1
      %p165 = por %p163, %p164
      %p167 = scmp.ne.s32.totalorder %s150, %s166
      %p168 = scmp.eq.s32.totalorder %s22, 0
      %p169 = por %p167, %p168
      %s170 = ssub.s32 %s16, %s23
      %p171 = scmp.eq.s32.totalorder %s170, 0
      %s173 = sadd.s32 %s172, 1
      %s174 = scalar_select %p171, %s172, %s173
      %p177 = pneg %p171
      %p178 = scmp.eq.s32.totalorder %s16, 1
      %p179 = por %p177, %p178
      %p180 = scmp.ne.s32.totalorder %s172, %s175
      %p181 = scmp.eq.s32.totalorder %s16, 0
      %p182 = por %p180, %p181
      %p183 = scmp.ne.s32.totalorder %s172, %s175
      %p184 = scmp.eq.s32.totalorder %s21, 1
      %p185 = por %p183, %p184
      %p186 = scmp.ne.s32.totalorder %s175, %s176
      %p187 = scmp.eq.s32.totalorder %s21, 0
      %p188 = por %p186, %p187
      %p189 = scmp.ne.s32.totalorder %s175, %s176
      %p190 = scmp.eq.s32.totalorder %s22, 1
      %p191 = por %p189, %p190
      %p193 = scmp.ne.s32.totalorder %s176, %s192
      %p194 = scmp.eq.s32.totalorder %s22, 0
      %p195 = por %p193, %p194
      %s196 = ssub.s32 %s16, %s23
      %p197 = scmp.eq.s32.totalorder %s196, 0
      %s199 = sadd.s32 %s198, 1
      %s200 = scalar_select %p197, %s198, %s199
      %p203 = pneg %p197
      %p204 = scmp.eq.s32.totalorder %s16, 1
      %p205 = por %p203, %p204
      %p206 = scmp.ne.s32.totalorder %s198, %s201
      %p207 = scmp.eq.s32.totalorder %s16, 0
      %p208 = por %p206, %p207
      %p209 = scmp.ne.s32.totalorder %s198, %s201
      %p210 = scmp.eq.s32.totalorder %s21, 1
      %p211 = por %p209, %p210
      %p212 = scmp.ne.s32.totalorder %s201, %s202
      %p213 = scmp.eq.s32.totalorder %s21, 0
      %p214 = por %p212, %p213
      %p215 = scmp.ne.s32.totalorder %s201, %s202
      %p216 = scmp.eq.s32.totalorder %s22, 1
      %p217 = por %p215, %p216
      %p219 = scmp.ne.s32.totalorder %s202, %s218
      %p220 = scmp.eq.s32.totalorder %s22, 0
      %p221 = por %p219, %p220
      %s223 = sadd.s32 %s222, 1
      %p226 = scmp.eq.s32.totalorder %s16, 1
      %p227 = scmp.ne.s32.totalorder %s222, %s224
      %p228 = scmp.eq.s32.totalorder %s16, 0
      %p229 = por %p227, %p228
      %p230 = scmp.ne.s32.totalorder %s222, %s224
      %p231 = scmp.eq.s32.totalorder %s21, 1
      %p232 = por %p230, %p231
      %p233 = scmp.ne.s32.totalorder %s224, %s225
      %p234 = scmp.eq.s32.totalorder %s21, 0
      %p235 = por %p233, %p234
      %p236 = scmp.ne.s32.totalorder %s224, %s225
      %p237 = scmp.eq.s32.totalorder %s22, 1
      %p238 = por %p236, %p237
      %p240 = scmp.ne.s32.totalorder %s225, %s239
      %p241 = scmp.eq.s32.totalorder %s22, 0
      %p242 = por %p240, %p241
      %s244 = sadd.s32 %s243, 1
      %p247 = scmp.eq.s32.totalorder %s16, 1
      %p248 = scmp.ne.s32.totalorder %s243, %s245
      %p249 = scmp.eq.s32.totalorder %s16, 0
      %p250 = por %p248, %p249
      %p251 = scmp.ne.s32.totalorder %s243, %s245
      %p252 = scmp.eq.s32.totalorder %s21, 1
      %p253 = por %p251, %p252
      %p254 = scmp.ne.s32.totalorder %s245, %s246
      %p255 = scmp.eq.s32.totalorder %s21, 0
      %p256 = por %p254, %p255
      %p257 = scmp.ne.s32.totalorder %s245, %s246
      %p258 = scmp.eq.s32.totalorder %s22, 1
      %p259 = por %p257, %p258
      %p261 = scmp.ne.s32.totalorder %s246, %s260
      %p262 = scmp.eq.s32.totalorder %s22, 0
      %p263 = por %p261, %p262
      %p264 = scmp.le.s32.totalorder 1, %s16
      %p265 = scmp.lt.s32.totalorder %s16, 3
      %p266 = pnand %p264, %p265
      %p267 = pneg %p266
      // Predicated region
      $region9: #{tpu_custom_call.1} parent=5 // pred_check
        _
      $region10: #{tpu_custom_call.1} parent=5 // pred_check_branch
        %269 = sbr.rel (%p266) target = $region12
      $region11: #{tpu_custom_call.1} parent=5 // pred_region
        %s270 = ssub.s32 %s16, 1
        // Predicated region
        $region13: #{tpu_custom_call.1} parent=11 // pred_check
          %p271 = pneg %p37
        $region14: #{tpu_custom_call.1} parent=11 // pred_check_branch
          %273 = sbr.rel (%p271) target = $region16
        $region15: #{tpu_custom_call.1} parent=11 // pred_region
          _
        $region16: #{tpu_custom_call.1} parent=11 // pred_fallthru
          _
        // Predicated region
        $region17: #{tpu_custom_call.1} parent=11 // pred_check
          %p274 = pneg %p58
        $region18: #{tpu_custom_call.1} parent=11 // pred_check_branch
          %276 = sbr.rel (%p274) target = $region20
        $region19: #{tpu_custom_call.1} parent=11 // pred_region
          _
        $region20: #{tpu_custom_call.1} parent=11 // pred_fallthru
          _
        // Predicated region
        $region21: #{tpu_custom_call.1} parent=11 // pred_check
          %p277 = pneg %p235
        $region22: #{tpu_custom_call.1} parent=11 // pred_check_branch
          %279 = sbr.rel (%p277) target = $region24
        $region23: #{tpu_custom_call.1} parent=11 // pred_region
          _
        $region24: #{tpu_custom_call.1} parent=11 // pred_fallthru
          _
      $region12: #{tpu_custom_call.1} parent=5 // pred_fallthru
        _
      %p280 = scmp.lt.s32.totalorder %s16, 2
      // Predicated region
      $region25: #{tpu_custom_call.1} parent=5 // pred_check
        %p281 = pneg %p280
      $region26: #{tpu_custom_call.1} parent=5 // pred_check_branch
        %283 = sbr.rel (%p281) target = $region28
      $region27: #{tpu_custom_call.1} parent=5 // pred_region
        // Predicated region
        $region29: #{tpu_custom_call.1} parent=27 // pred_check
          %p284 = pneg %p78
        $region30: #{tpu_custom_call.1} parent=27 // pred_check_branch
          %286 = sbr.rel (%p284) target = $region32
        $region31: #{tpu_custom_call.1} parent=27 // pred_region
          %p287 = scmp.lt.s32.totalorder %s16, 1
          %s288 = scalar_select %p287, %s16, 1
          %s289 = scalar_lea.vmem %s2, %s288
        $region32: #{tpu_custom_call.1} parent=27 // pred_fallthru
          _
        // Predicated region
        $region33: #{tpu_custom_call.1} parent=27 // pred_check
          %p290 = pneg %p104
        $region34: #{tpu_custom_call.1} parent=27 // pred_check_branch
          %292 = sbr.rel (%p290) target = $region36
        $region35: #{tpu_custom_call.1} parent=27 // pred_region
          %p293 = scmp.lt.s32.totalorder %s16, 1
          %s294 = scalar_select %p293, %s16, 1
          %s295 = smul.addr %s294, 16
          %s296 = smul.addr %s295, 8
          %s297 = scalar_lea.vmem %s3, %s296
        $region36: #{tpu_custom_call.1} parent=27 // pred_fallthru
          _
        // Predicated region
        $region37: #{tpu_custom_call.1} parent=27 // pred_check
          %p298 = pneg %p130
        $region38: #{tpu_custom_call.1} parent=27 // pred_check_branch
          %300 = sbr.rel (%p298) target = $region40
        $region39: #{tpu_custom_call.1} parent=27 // pred_region
          %p301 = scmp.lt.s32.totalorder %s16, 1
          %s302 = scalar_select %p301, %s16, 1
          %s303 = smul.addr %s302, 4
          %s304 = smul.addr %s303, 8
          %s305 = scalar_lea.vmem %s4, %s304
        $region40: #{tpu_custom_call.1} parent=27 // pred_fallthru
          _
        // Predicated region
        $region41: #{tpu_custom_call.1} parent=27 // pred_check
          %p306 = pneg %p156
        $region42: #{tpu_custom_call.1} parent=27 // pred_check_branch
          %308 = sbr.rel (%p306) target = $region44
        $region43: #{tpu_custom_call.1} parent=27 // pred_region
          %p309 = scmp.lt.s32.totalorder %s16, 1
          %s310 = scalar_select %p309, %s16, 1
          %s311 = scalar_lea.vmem %s5, %s310
        $region44: #{tpu_custom_call.1} parent=27 // pred_fallthru
          _
        // Predicated region
        $region45: #{tpu_custom_call.1} parent=27 // pred_check
          %p312 = pneg %p182
        $region46: #{tpu_custom_call.1} parent=27 // pred_check_branch
          %314 = sbr.rel (%p312) target = $region48
        $region47: #{tpu_custom_call.1} parent=27 // pred_region
          %p315 = scmp.lt.s32.totalorder %s16, 1
          %s316 = scalar_select %p315, %s16, 1
          %s317 = smul.addr %s316, 4
          %s318 = smul.addr %s317, 8
          %s319 = scalar_lea.vmem %s6, %s318
        $region48: #{tpu_custom_call.1} parent=27 // pred_fallthru
          _
        // Predicated region
        $region49: #{tpu_custom_call.1} parent=27 // pred_check
          %p320 = pneg %p208
        $region50: #{tpu_custom_call.1} parent=27 // pred_check_branch
          %322 = sbr.rel (%p320) target = $region52
        $region51: #{tpu_custom_call.1} parent=27 // pred_region
          %p323 = scmp.lt.s32.totalorder %s16, 1
          %s324 = scalar_select %p323, %s16, 1
          %s325 = smul.addr %s324, 8
          %s326 = smul.addr %s325, 8
          %s327 = scalar_lea.vmem %s7, %s326
        $region52: #{tpu_custom_call.1} parent=27 // pred_fallthru
          _
      $region28: #{tpu_custom_call.1} parent=5 // pred_fallthru
        _
      %p328 = scmp.le.s32.totalorder 1, %s16
      %p329 = scmp.lt.s32.totalorder %s16, 3
      %p330 = pnand %p328, %p329
      %p331 = pneg %p330
      // Predicated region
      $region53: #{tpu_custom_call.1} parent=5 // pred_check
        _
      $region54: #{tpu_custom_call.1} parent=5 // pred_check_branch
        %333 = sbr.rel (%p330) target = $region56
      $region55: #{tpu_custom_call.1} parent=5 // pred_region
        %s334 = ssub.s32 %s16, 1
        %p335 = pneg %p37
        %p336 = pneg %p34
        %p337 = pneg %p58
        %p338 = pneg %p55
        %p339 = scmp.lt.s32.totalorder %s21, 1
        %s340 = scalar_select %p339, %s21, 1
        %s341 = scalar_lea.vmem %s2, %s340
        %p342 = pneg %p84
        %p343 = pneg %p81
        %p344 = scmp.lt.s32.totalorder %s21, 1
        %s345 = scalar_select %p344, %s21, 1
        %s346 = smul.addr %s345, 16
        %s347 = smul.addr %s346, 8
        %s348 = scalar_lea.vmem %s3, %s347
        %p349 = pneg %p110
        %p350 = pneg %p107
        %p351 = scmp.lt.s32.totalorder %s21, 1
        %s352 = scalar_select %p351, %s21, 1
        %s353 = smul.addr %s352, 4
        %s354 = smul.addr %s353, 8
        %s355 = scalar_lea.vmem %s4, %s354
        %p356 = pneg %p136
        %p357 = pneg %p133
        %p358 = scmp.lt.s32.totalorder %s21, 1
        %s359 = scalar_select %p358, %s21, 1
        %s360 = scalar_lea.vmem %s5, %s359
        %p361 = pneg %p162
        %p362 = pneg %p159
        %p363 = scmp.lt.s32.totalorder %s21, 1
        %s364 = scalar_select %p363, %s21, 1
        %s365 = smul.addr %s364, 4
        %s366 = smul.addr %s365, 8
        %s367 = scalar_lea.vmem %s6, %s366
        %p368 = pneg %p188
        %p369 = pneg %p185
        %p370 = scmp.lt.s32.totalorder %s21, 1
        %s371 = scalar_select %p370, %s21, 1
        %s372 = smul.addr %s371, 8
        %s373 = smul.addr %s372, 8
        %s374 = scalar_lea.vmem %s7, %s373
        %p375 = pneg %p214
        %p376 = pneg %p211
        %p377 = pneg %p235
        %p378 = pneg %p232
        %p379 = pneg %p256
        %p380 = pneg %p253
        %p381 = scmp.lt.s32.totalorder %s21, 1
        %s382 = scalar_select %p381, %s21, 1
        %s383 = scalar_lea.vmem %s2, %s382
        %p384 = scmp.lt.s32.totalorder %s21, 1
        %s385 = scalar_select %p384, %s21, 1
        %s386 = smul.addr %s385, 16
        %s387 = smul.addr %s386, 8
        %s388 = scalar_lea.vmem %s3, %s387
        %p389 = scmp.lt.s32.totalorder %s21, 1
        %s390 = scalar_select %p389, %s21, 1
        %s391 = smul.addr %s390, 4
        %s392 = smul.addr %s391, 8
        %s393 = scalar_lea.vmem %s4, %s392
        %p394 = scmp.lt.s32.totalorder %s21, 1
        %s395 = scalar_select %p394, %s21, 1
        %s396 = scalar_lea.vmem %s5, %s395
        %p397 = scmp.lt.s32.totalorder %s21, 1
        %s398 = scalar_select %p397, %s21, 1
        %s399 = smul.addr %s398, 4
        %s400 = smul.addr %s399, 8
        %s401 = scalar_lea.vmem %s6, %s400
        %p402 = scmp.lt.s32.totalorder %s21, 1
        %s403 = scalar_select %p402, %s21, 1
        %s404 = smul.addr %s403, 8
        %s405 = smul.addr %s404, 8
        %s406 = scalar_lea.vmem %s7, %s405
        %p407 = scmp.eq.s32.totalorder %s21, 0
        // Predicated region
        $region57: #{tpu_custom_call.1} parent=55 // pred_check
          %p408 = pneg %p407
        $region58: #{tpu_custom_call.1} parent=55 // pred_check_branch
          %410 = sbr.rel (%p408) target = $region60
        $region59: #{tpu_custom_call.1} parent=55 // pred_region
          %v411 = vld [vmem:[%s0] sm:$0xff]
          %v412 = vld [vmem:[%s0 + $0x8] sm:$0xff]
          %vm413 = vcmask 261120
          %414 = vst.msk [vmem:[#allocation2] sm:$0xff] %vm413, %v411
          %415 = vst.msk [vmem:[#allocation2 + $0x8] sm:$0xff] %vm413, %v412
        $region60: #{tpu_custom_call.1} parent=55 // pred_fallthru
          _
        %v416 = vld [vmem:[#allocation2] sm:$0xff]
        %v417 = vld [vmem:[#allocation2 + $0x8] sm:$0xff]
        %v418 = vld [vmem:[%s383] sm:$0x1]
        %v419 = vmul.f32 %v416, %v416
        %v420 = vmul.f32 %v417, %v417
        %vm421 = vcmask 261120
        %v422 = vsel %vm421, %v419, 0.0
        %423 = vadd.xlane.f32.xlu0 %v422
        %v424 = vpop.xlane.xlu0 %423
        %v425 = vsel %vm421, %v420, 0.0
        %426 = vadd.xlane.f32.xlu0 %v425
        %v427 = vpop.xlane.xlu0 %426
        %v428 = vrcp.pop 32.0
        %v429 = vmul.f32 %v424, %v428
        %v430 = vmul.f32 %v427, %v428
        %v431 = vadd.f32 %v429, 1e-06
        %v432 = vadd.f32 %v430, 1e-06
        %v433 = vrsqrt.pop %v431
        %v434 = vrsqrt.pop %v432
        %v435 = vmul.f32 %v416, %v433
        %v436 = vmul.f32 %v417, %v434
        %v438 = vlaneseq
        %v439 = vshrl.u32 %v438, 7
        %v440 = vsub.s32 0, %v439
        %v441 = vrot.slane %v418, %v440
        %v443 = vmul.f32 %v435, %v441
        %v444 = vmul.f32 %v436, %v441
        %v445 = vld [vmem:[%s388] sm:$0xff]
        %v446 = vld [vmem:[%s388 + $0x8] sm:$0xff]
        %v447 = vld [vmem:[%s388 + $0x10] sm:$0xff]
        %v448 = vld [vmem:[%s388 + $0x18] sm:$0xff]
        %v449 = vld [vmem:[%s388 + $0x20] sm:$0xff]
        %v450 = vld [vmem:[%s388 + $0x28] sm:$0xff]
        %v451 = vld [vmem:[%s388 + $0x30] sm:$0xff]
        %v452 = vld [vmem:[%s388 + $0x38] sm:$0xff]
        %v453 = vld [vmem:[%s388 + $0x40] sm:$0xff]
        %v454 = vld [vmem:[%s388 + $0x48] sm:$0xff]
        %v455 = vld [vmem:[%s388 + $0x50] sm:$0xff]
        %v456 = vld [vmem:[%s388 + $0x58] sm:$0xff]
        %v457 = vld [vmem:[%s388 + $0x60] sm:$0xff]
        %v458 = vld [vmem:[%s388 + $0x68] sm:$0xff]
        %v459 = vld [vmem:[%s388 + $0x70] sm:$0xff]
        %v460 = vld [vmem:[%s388 + $0x78] sm:$0xff]
        %v462 = vsel %vm421, %v443, 0
        %v465 = vsel %vm421, %v444, 0
        %467 = vmatprep.subr.mxu0 0.0
        %468 = vmatpush1.msra.mxu0 %v445
        %469 = vmatprep.subr.mxu0 0.0
        %470 = vmatpush1.msra.mxu0 %v446
        %471 = vmatprep.subr.mxu0 0.0
        %472 = vmatpush1.msra.mxu0 %v447
        %473 = vmatprep.subr.mxu0 0.0
        %474 = vmatpush1.msra.mxu0 %v448
        %475 = vmatprep.subr.mxu0 0.0
        %476 = vmatpush1.msra.mxu0 0.0
        %477 = vmatprep.subr.mxu0 0.0
        %478 = vmatpush1.msra.mxu0 0.0
        %479 = vmatprep.subr.mxu0 0.0
        %480 = vmatpush1.msra.mxu0 0.0
        %481 = vmatprep.subr.mxu0 0.0
        %482 = vmatpush1.msra.mxu0 0.0
        %483 = vmatprep.subr.mxu0 0.0
        %484 = vmatpush1.msra.mxu0 0.0
        %485 = vmatprep.subr.mxu0 0.0
        %486 = vmatpush1.msra.mxu0 0.0
        %487 = vmatprep.subr.mxu0 0.0
        %488 = vmatpush1.msra.mxu0 0.0
        %489 = vmatprep.subr.mxu0 0.0
        %490 = vmatpush1.msra.mxu0 0.0
        %491 = vmatprep.subr.mxu0 0.0
        %492 = vmatpush1.msra.mxu0 0.0
        %493 = vmatprep.subr.mxu0 0.0
        %494 = vmatpush1.msra.mxu0 0.0
        %495 = vmatprep.subr.mxu0 0.0
        %496 = vmatpush1.msra.mxu0 0.0
        %497 = vmatprep.subr.mxu0 0.0
        %498 = vmatpush1.msra.mxu0 0.0
        %499 = vmatprep.subr.mxu0 0.0
        %500 = vmatpush1.msra.mxu0 0.0
        %501 = vmatprep.subr.mxu0 0.0
        %502 = vmatpush1.msra.mxu0 0.0
        %503 = vmatprep.subr.mxu0 0.0
        %504 = vmatpush1.msra.mxu0 0.0
        %505 = vmatprep.subr.mxu0 0.0
        %506 = vmatpush1.msra.mxu0 0.0
        %507 = vmatprep.subr.mxu0 0.0
        %508 = vmatpush1.msra.mxu0 0.0
        %509 = vmatprep.subr.mxu0 0.0
        %510 = vmatpush1.msra.mxu0 0.0
        %511 = vmatprep.subr.mxu0 0.0
        %512 = vmatpush1.msra.mxu0 0.0
        %513 = vmatprep.subr.mxu0 0.0
        %514 = vmatpush1.msra.mxu0 0.0
        %515 = vmatprep.subr.mxu0 0.0
        %516 = vmatpush1.msra.mxu0 0.0
        %517 = vmatprep.subr.mxu0 0.0
        %518 = vmatpush1.msra.mxu0 0.0
        %519 = vmatprep.subr.mxu0 0.0
        %520 = vmatpush1.msra.mxu0 0.0
        %521 = vmatprep.subr.mxu0 0.0
        %522 = vmatpush1.msra.mxu0 0.0
        %523 = vmatprep.subr.mxu0 0.0
        %524 = vmatpush1.msra.mxu0 0.0
        %525 = vmatprep.subr.mxu0 0.0
        %526 = vmatpush1.msra.mxu0 0.0
        %527 = vmatprep.subr.mxu0 0.0
        %528 = vmatpush1.msra.mxu0 0.0
        %529 = vmatprep.subr.mxu0 0.0
        %530 = vmatpush1.msra.mxu0 0.0
        %531 = vmatprep.mubr.f32.mxu0 0.0
        %532 = vmatmul.mubr.f32.gmra.mrb[0].mxu0 %v462
        %v533 = vpop.f32.mrb[0].mxu0
        %v534 = vadd.f32 0.0, %v533
        %v535 = vpop.f32.mrb[0].mxu0
        %536 = vmatprep.mubr.f32.mxu0 0.0
        %537 = vmatmul.mubr.f32.gmra.mrb[0].mxu0 %v465
        %v538 = vpop.f32.mrb[0].mxu0
        %v539 = vadd.f32 0.0, %v538
        %v540 = vpop.f32.mrb[0].mxu0
        %541 = vdwg.mxu0
        %542 = vmatprep.subr.mxu0 0.0
        %543 = vmatpush1.msra.mxu0 %v449
        %544 = vmatprep.subr.mxu0 0.0
        %545 = vmatpush1.msra.mxu0 %v450
        %546 = vmatprep.subr.mxu0 0.0
        %547 = vmatpush1.msra.mxu0 %v451
        %548 = vmatprep.subr.mxu0 0.0
        %549 = vmatpush1.msra.mxu0 %v452
        %550 = vmatprep.subr.mxu0 0.0
        %551 = vmatpush1.msra.mxu0 0.0
        %552 = vmatprep.subr.mxu0 0.0
        %553 = vmatpush1.msra.mxu0 0.0
        %554 = vmatprep.subr.mxu0 0.0
        %555 = vmatpush1.msra.mxu0 0.0
        %556 = vmatprep.subr.mxu0 0.0
        %557 = vmatpush1.msra.mxu0 0.0
        %558 = vmatprep.subr.mxu0 0.0
        %559 = vmatpush1.msra.mxu0 0.0
        %560 = vmatprep.subr.mxu0 0.0
        %561 = vmatpush1.msra.mxu0 0.0
        %562 = vmatprep.subr.mxu0 0.0
        %563 = vmatpush1.msra.mxu0 0.0
        %564 = vmatprep.subr.mxu0 0.0
        %565 = vmatpush1.msra.mxu0 0.0
        %566 = vmatprep.subr.mxu0 0.0
        %567 = vmatpush1.msra.mxu0 0.0
        %568 = vmatprep.subr.mxu0 0.0
        %569 = vmatpush1.msra.mxu0 0.0
        %570 = vmatprep.subr.mxu0 0.0
        %571 = vmatpush1.msra.mxu0 0.0
        %572 = vmatprep.subr.mxu0 0.0
        %573 = vmatpush1.msra.mxu0 0.0
        %574 = vmatprep.subr.mxu0 0.0
        %575 = vmatpush1.msra.mxu0 0.0
        %576 = vmatprep.subr.mxu0 0.0
        %577 = vmatpush1.msra.mxu0 0.0
        %578 = vmatprep.subr.mxu0 0.0
        %579 = vmatpush1.msra.mxu0 0.0
        %580 = vmatprep.subr.mxu0 0.0
        %581 = vmatpush1.msra.mxu0 0.0
        %582 = vmatprep.subr.mxu0 0.0
        %583 = vmatpush1.msra.mxu0 0.0
        %584 = vmatprep.subr.mxu0 0.0
        %585 = vmatpush1.msra.mxu0 0.0
        %586 = vmatprep.subr.mxu0 0.0
        %587 = vmatpush1.msra.mxu0 0.0
        %588 = vmatprep.subr.mxu0 0.0
        %589 = vmatpush1.msra.mxu0 0.0
        %590 = vmatprep.subr.mxu0 0.0
        %591 = vmatpush1.msra.mxu0 0.0
        %592 = vmatprep.subr.mxu0 0.0
        %593 = vmatpush1.msra.mxu0 0.0
        %594 = vmatprep.subr.mxu0 0.0
        %595 = vmatpush1.msra.mxu0 0.0
        %596 = vmatprep.subr.mxu0 0.0
        %597 = vmatpush1.msra.mxu0 0.0
        %598 = vmatprep.subr.mxu0 0.0
        %599 = vmatpush1.msra.mxu0 0.0
        %600 = vmatprep.subr.mxu0 0.0
        %601 = vmatpush1.msra.mxu0 0.0
        %602 = vmatprep.subr.mxu0 0.0
        %603 = vmatpush1.msra.mxu0 0.0
        %604 = vmatprep.subr.mxu0 0.0
        %605 = vmatpush1.msra.mxu0 0.0
        %606 = vmatprep.mubr.f32.mxu0 0.0
        %607 = vmatmul.mubr.f32.gmra.mrb[0].mxu0 %v462
        %v608 = vpop.f32.mrb[0].mxu0
        %v609 = vadd.f32 0.0, %v608
        %v610 = vpop.f32.mrb[0].mxu0
        %611 = vmatprep.mubr.f32.mxu0 0.0
        %612 = vmatmul.mubr.f32.gmra.mrb[0].mxu0 %v465
        %v613 = vpop.f32.mrb[0].mxu0
        %v614 = vadd.f32 0.0, %v613
        %v615 = vpop.f32.mrb[0].mxu0
        %616 = vdwg.mxu0
        %617 = vmatprep.subr.mxu0 0.0
        %618 = vmatpush1.msra.mxu0 %v453
        %619 = vmatprep.subr.mxu0 0.0
        %620 = vmatpush1.msra.mxu0 %v454
        %621 = vmatprep.subr.mxu0 0.0
        %622 = vmatpush1.msra.mxu0 %v455
        %623 = vmatprep.subr.mxu0 0.0
        %624 = vmatpush1.msra.mxu0 %v456
        %625 = vmatprep.subr.mxu0 0.0
        %626 = vmatpush1.msra.mxu0 0.0
        %627 = vmatprep.subr.mxu0 0.0
        %628 = vmatpush1.msra.mxu0 0.0
        %629 = vmatprep.subr.mxu0 0.0
        %630 = vmatpush1.msra.mxu0 0.0
        %631 = vmatprep.subr.mxu0 0.0
        %632 = vmatpush1.msra.mxu0 0.0
        %633 = vmatprep.subr.mxu0 0.0
        %634 = vmatpush1.msra.mxu0 0.0
        %635 = vmatprep.subr.mxu0 0.0
        %636 = vmatpush1.msra.mxu0 0.0
        %637 = vmatprep.subr.mxu0 0.0
        %638 = vmatpush1.msra.mxu0 0.0
        %639 = vmatprep.subr.mxu0 0.0
        %640 = vmatpush1.msra.mxu0 0.0
        %641 = vmatprep.subr.mxu0 0.0
        %642 = vmatpush1.msra.mxu0 0.0
        %643 = vmatprep.subr.mxu0 0.0
        %644 = vmatpush1.msra.mxu0 0.0
        %645 = vmatprep.subr.mxu0 0.0
        %646 = vmatpush1.msra.mxu0 0.0
        %647 = vmatprep.subr.mxu0 0.0
        %648 = vmatpush1.msra.mxu0 0.0
        %649 = vmatprep.subr.mxu0 0.0
        %650 = vmatpush1.msra.mxu0 0.0
        %651 = vmatprep.subr.mxu0 0.0
        %652 = vmatpush1.msra.mxu0 0.0
        %653 = vmatprep.subr.mxu0 0.0
        %654 = vmatpush1.msra.mxu0 0.0
        %655 = vmatprep.subr.mxu0 0.0
        %656 = vmatpush1.msra.mxu0 0.0
        %657 = vmatprep.subr.mxu0 0.0
        %658 = vmatpush1.msra.mxu0 0.0
        %659 = vmatprep.subr.mxu0 0.0
        %660 = vmatpush1.msra.mxu0 0.0
        %661 = vmatprep.subr.mxu0 0.0
        %662 = vmatpush1.msra.mxu0 0.0
        %663 = vmatprep.subr.mxu0 0.0
        %664 = vmatpush1.msra.mxu0 0.0
        %665 = vmatprep.subr.mxu0 0.0
        %666 = vmatpush1.msra.mxu0 0.0
        %667 = vmatprep.subr.mxu0 0.0
        %668 = vmatpush1.msra.mxu0 0.0
        %669 = vmatprep.subr.mxu0 0.0
        %670 = vmatpush1.msra.mxu0 0.0
        %671 = vmatprep.subr.mxu0 0.0
        %672 = vmatpush1.msra.mxu0 0.0
        %673 = vmatprep.subr.mxu0 0.0
        %674 = vmatpush1.msra.mxu0 0.0
        %675 = vmatprep.subr.mxu0 0.0
        %676 = vmatpush1.msra.mxu0 0.0
        %677 = vmatprep.subr.mxu0 0.0
        %678 = vmatpush1.msra.mxu0 0.0
        %679 = vmatprep.subr.mxu0 0.0
        %680 = vmatpush1.msra.mxu0 0.0
        %681 = vmatprep.mubr.f32.mxu0 0.0
        %682 = vmatmul.mubr.f32.gmra.mrb[0].mxu0 %v462
        %v683 = vpop.f32.mrb[0].mxu0
        %v684 = vadd.f32 0.0, %v683
        %v685 = vpop.f32.mrb[0].mxu0
        %686 = vmatprep.mubr.f32.mxu0 0.0
        %687 = vmatmul.mubr.f32.gmra.mrb[0].mxu0 %v465
        %v688 = vpop.f32.mrb[0].mxu0
        %v689 = vadd.f32 0.0, %v688
        %v690 = vpop.f32.mrb[0].mxu0
        %691 = vdwg.mxu0
        %692 = vmatprep.subr.mxu0 0.0
        %693 = vmatpush1.msra.mxu0 %v457
        %694 = vmatprep.subr.mxu0 0.0
        %695 = vmatpush1.msra.mxu0 %v458
        %696 = vmatprep.subr.mxu0 0.0
        %697 = vmatpush1.msra.mxu0 %v459
        %698 = vmatprep.subr.mxu0 0.0
        %699 = vmatpush1.msra.mxu0 %v460
        %700 = vmatprep.subr.mxu0 0.0
        %701 = vmatpush1.msra.mxu0 0.0
        %702 = vmatprep.subr.mxu0 0.0
        %703 = vmatpush1.msra.mxu0 0.0
        %704 = vmatprep.subr.mxu0 0.0
        %705 = vmatpush1.msra.mxu0 0.0
        %706 = vmatprep.subr.mxu0 0.0
        %707 = vmatpush1.msra.mxu0 0.0
        %708 = vmatprep.subr.mxu0 0.0
        %709 = vmatpush1.msra.mxu0 0.0
        %710 = vmatprep.subr.mxu0 0.0
        %711 = vmatpush1.msra.mxu0 0.0
        %712 = vmatprep.subr.mxu0 0.0
        %713 = vmatpush1.msra.mxu0 0.0
        %714 = vmatprep.subr.mxu0 0.0
        %715 = vmatpush1.msra.mxu0 0.0
        %716 = vmatprep.subr.mxu0 0.0
        %717 = vmatpush1.msra.mxu0 0.0
        %718 = vmatprep.subr.mxu0 0.0
        %719 = vmatpush1.msra.mxu0 0.0
        %720 = vmatprep.subr.mxu0 0.0
        %721 = vmatpush1.msra.mxu0 0.0
        %722 = vmatprep.subr.mxu0 0.0
        %723 = vmatpush1.msra.mxu0 0.0
        %724 = vmatprep.subr.mxu0 0.0
        %725 = vmatpush1.msra.mxu0 0.0
        %726 = vmatprep.subr.mxu0 0.0
        %727 = vmatpush1.msra.mxu0 0.0
        %728 = vmatprep.subr.mxu0 0.0
        %729 = vmatpush1.msra.mxu0 0.0
        %730 = vmatprep.subr.mxu0 0.0
        %731 = vmatpush1.msra.mxu0 0.0
        %732 = vmatprep.subr.mxu0 0.0
        %733 = vmatpush1.msra.mxu0 0.0
        %734 = vmatprep.subr.mxu0 0.0
        %735 = vmatpush1.msra.mxu0 0.0
        %736 = vmatprep.subr.mxu0 0.0
        %737 = vmatpush1.msra.mxu0 0.0
        %738 = vmatprep.subr.mxu0 0.0
        %739 = vmatpush1.msra.mxu0 0.0
        %740 = vmatprep.subr.mxu0 0.0
        %741 = vmatpush1.msra.mxu0 0.0
        %742 = vmatprep.subr.mxu0 0.0
        %743 = vmatpush1.msra.mxu0 0.0
        %744 = vmatprep.subr.mxu0 0.0
        %745 = vmatpush1.msra.mxu0 0.0
        %746 = vmatprep.subr.mxu0 0.0
        %747 = vmatpush1.msra.mxu0 0.0
        %748 = vmatprep.subr.mxu0 0.0
        %749 = vmatpush1.msra.mxu0 0.0
        %750 = vmatprep.subr.mxu0 0.0
        %751 = vmatpush1.msra.mxu0 0.0
        %752 = vmatprep.subr.mxu0 0.0
        %753 = vmatpush1.msra.mxu0 0.0
        %754 = vmatprep.subr.mxu0 0.0
        %755 = vmatpush1.msra.mxu0 0.0
        %756 = vmatprep.mubr.f32.mxu0 0.0
        %757 = vmatmul.mubr.f32.gmra.mrb[0].mxu0 %v462
        %v758 = vpop.f32.mrb[0].mxu0
        %v759 = vadd.f32 0.0, %v758
        %v760 = vpop.f32.mrb[0].mxu0
        %761 = vmatprep.mubr.f32.mxu0 0.0
        %762 = vmatmul.mubr.f32.gmra.mrb[0].mxu0 %v465
        %v763 = vpop.f32.mrb[0].mxu0
        %v764 = vadd.f32 0.0, %v763
        %v765 = vpop.f32.mrb[0].mxu0
        %766 = vdwg.mxu0
        %v767 = vld [vmem:[%s1] sm:$0xff]
        %v768 = vld [vmem:[%s1 + $0x8] sm:$0xff]
        %v769 = vld [vmem:[%s1 + $0x10] sm:$0xff]
        %v770 = vld [vmem:[%s1 + $0x18] sm:$0xff]
        %v771 = vld [vmem:[%s1 + $0x20] sm:$0xff]
        %v772 = vld [vmem:[%s1 + $0x28] sm:$0xff]
        %v773 = vld [vmem:[%s1 + $0x30] sm:$0xff]
        %v774 = vld [vmem:[%s1 + $0x38] sm:$0xff]
        %777 = vrot.lane.b32.xlu0 %v534, 120
        %v778 = vpop.permute.xlu0 %777
        %779 = vrot.lane.b32.xlu0 %v539, 120
        %v780 = vpop.permute.xlu0 %779
        %vm781 = vcmask 64512
        %v782 = vsel %vm781, %v534, 0
        %v784 = vsel %vm781, %v539, 0
        %v786 = vsel %vm781, %v778, 0
        %v788 = vsel %vm781, %v780, 0
        %790 = vmatprep.subr.mxu0 0.0
        %791 = vmatpush1.xpose.msra.mxu0 %v786
        %792 = vmatprep.subr.mxu0 0.0
        %793 = vmatpush1.xpose.msra.mxu0 %v788
        %794 = vmatprep.subr.mxu0 0.0
        %795 = vmatpush1.xpose.msra.mxu0 0.0
        %796 = vmatprep.subr.mxu0 0.0
        %797 = vmatpush1.xpose.msra.mxu0 0.0
        %798 = vmatprep.subr.mxu0 0.0
        %799 = vmatpush1.xpose.msra.mxu0 0.0
        %800 = vmatprep.subr.mxu0 0.0
        %801 = vmatpush1.xpose.msra.mxu0 0.0
        %802 = vmatprep.subr.mxu0 0.0
        %803 = vmatpush1.xpose.msra.mxu0 0.0
        %804 = vmatprep.subr.mxu0 0.0
        %805 = vmatpush1.xpose.msra.mxu0 0.0
        %806 = vmatprep.subr.mxu0 0.0
        %807 = vmatpush1.xpose.msra.mxu0 0.0
        %808 = vmatprep.subr.mxu0 0.0
        %809 = vmatpush1.xpose.msra.mxu0 0.0
        %810 = vmatprep.subr.mxu0 0.0
        %811 = vmatpush1.xpose.msra.mxu0 0.0
        %812 = vmatprep.subr.mxu0 0.0
        %813 = vmatpush1.xpose.msra.mxu0 0.0
        %814 = vmatprep.subr.mxu0 0.0
        %815 = vmatpush1.xpose.msra.mxu0 0.0
        %816 = vmatprep.subr.mxu0 0.0
        %817 = vmatpush1.xpose.msra.mxu0 0.0
        %818 = vmatprep.subr.mxu0 0.0
        %819 = vmatpush1.xpose.msra.mxu0 0.0
        %820 = vmatprep.subr.mxu0 0.0
        %821 = vmatpush1.xpose.msra.mxu0 0.0
        %822 = vmatprep.subr.mxu0 0.0
        %823 = vmatpush1.xpose.msra.mxu0 0.0
        %824 = vmatprep.subr.mxu0 0.0
        %825 = vmatpush1.xpose.msra.mxu0 0.0
        %826 = vmatprep.subr.mxu0 0.0
        %827 = vmatpush1.xpose.msra.mxu0 0.0
        %828 = vmatprep.subr.mxu0 0.0
        %829 = vmatpush1.xpose.msra.mxu0 0.0
        %830 = vmatprep.subr.mxu0 0.0
        %831 = vmatpush1.xpose.msra.mxu0 0.0
        %832 = vmatprep.subr.mxu0 0.0
        %833 = vmatpush1.xpose.msra.mxu0 0.0
        %834 = vmatprep.subr.mxu0 0.0
        %835 = vmatpush1.xpose.msra.mxu0 0.0
        %836 = vmatprep.subr.mxu0 0.0
        %837 = vmatpush1.xpose.msra.mxu0 0.0
        %838 = vmatprep.subr.mxu0 0.0
        %839 = vmatpush1.xpose.msra.mxu0 0.0
        %840 = vmatprep.subr.mxu0 0.0
        %841 = vmatpush1.xpose.msra.mxu0 0.0
        %842 = vmatprep.subr.mxu0 0.0
        %843 = vmatpush1.xpose.msra.mxu0 0.0
        %844 = vmatprep.subr.mxu0 0.0
        %845 = vmatpush1.xpose.msra.mxu0 0.0
        %846 = vmatprep.subr.mxu0 0.0
        %847 = vmatpush1.xpose.msra.mxu0 0.0
        %848 = vmatprep.subr.mxu0 0.0
        %849 = vmatpush1.xpose.msra.mxu0 0.0
        %850 = vmatprep.subr.mxu0 0.0
        %851 = vmatpush1.xpose.msra.mxu0 0.0
        %852 = vmatprep.subr.mxu0 0.0
        %853 = vmatpush1.xpose.msra.mxu0 0.0
        %854 = vmatprep.mubr.f32.mxu0 0.0
        %855 = vmatmul.mubr.f32.gmra.mrb[0].mxu0 %v782
        %v856 = vpop.f32.mrb[0].mxu0
        %v857 = vadd.f32 %v767, %v856
        %v858 = vpop.f32.mrb[0].mxu0
        %859 = vmatprep.mubr.f32.mxu0 0.0
        %860 = vmatmul.mubr.f32.gmra.mrb[0].mxu0 %v784
        %v861 = vpop.f32.mrb[0].mxu0
        %v862 = vadd.f32 %v768, %v861
        %v863 = vpop.f32.mrb[0].mxu0
        %864 = vdwg.mxu0
        %867 = vrot.lane.b32.xlu0 %v609, 120
        %v868 = vpop.permute.xlu0 %867
        %869 = vrot.lane.b32.xlu0 %v614, 120
        %v870 = vpop.permute.xlu0 %869
        %v871 = vsel %vm781, %v609, 0
        %v873 = vsel %vm781, %v614, 0
        %v875 = vsel %vm781, %v868, 0
        %v877 = vsel %vm781, %v870, 0
        %879 = vmatprep.subr.mxu0 0.0
        %880 = vmatpush1.xpose.msra.mxu0 %v875
        %881 = vmatprep.subr.mxu0 0.0
        %882 = vmatpush1.xpose.msra.mxu0 %v877
        %883 = vmatprep.subr.mxu0 0.0
        %884 = vmatpush1.xpose.msra.mxu0 0.0
        %885 = vmatprep.subr.mxu0 0.0
        %886 = vmatpush1.xpose.msra.mxu0 0.0
        %887 = vmatprep.subr.mxu0 0.0
        %888 = vmatpush1.xpose.msra.mxu0 0.0
        %889 = vmatprep.subr.mxu0 0.0
        %890 = vmatpush1.xpose.msra.mxu0 0.0
        %891 = vmatprep.subr.mxu0 0.0
        %892 = vmatpush1.xpose.msra.mxu0 0.0
        %893 = vmatprep.subr.mxu0 0.0
        %894 = vmatpush1.xpose.msra.mxu0 0.0
        %895 = vmatprep.subr.mxu0 0.0
        %896 = vmatpush1.xpose.msra.mxu0 0.0
        %897 = vmatprep.subr.mxu0 0.0
        %898 = vmatpush1.xpose.msra.mxu0 0.0
        %899 = vmatprep.subr.mxu0 0.0
        %900 = vmatpush1.xpose.msra.mxu0 0.0
        %901 = vmatprep.subr.mxu0 0.0
        %902 = vmatpush1.xpose.msra.mxu0 0.0
        %903 = vmatprep.subr.mxu0 0.0
        %904 = vmatpush1.xpose.msra.mxu0 0.0
        %905 = vmatprep.subr.mxu0 0.0
        %906 = vmatpush1.xpose.msra.mxu0 0.0
        %907 = vmatprep.subr.mxu0 0.0
        %908 = vmatpush1.xpose.msra.mxu0 0.0
        %909 = vmatprep.subr.mxu0 0.0
        %910 = vmatpush1.xpose.msra.mxu0 0.0
        %911 = vmatprep.subr.mxu0 0.0
        %912 = vmatpush1.xpose.msra.mxu0 0.0
        %913 = vmatprep.subr.mxu0 0.0
        %914 = vmatpush1.xpose.msra.mxu0 0.0
        %915 = vmatprep.subr.mxu0 0.0
        %916 = vmatpush1.xpose.msra.mxu0 0.0
        %917 = vmatprep.subr.mxu0 0.0
        %918 = vmatpush1.xpose.msra.mxu0 0.0
        %919 = vmatprep.subr.mxu0 0.0
        %920 = vmatpush1.xpose.msra.mxu0 0.0
        %921 = vmatprep.subr.mxu0 0.0
        %922 = vmatpush1.xpose.msra.mxu0 0.0
        %923 = vmatprep.subr.mxu0 0.0
        %924 = vmatpush1.xpose.msra.mxu0 0.0
        %925 = vmatprep.subr.mxu0 0.0
        %926 = vmatpush1.xpose.msra.mxu0 0.0
        %927 = vmatprep.subr.mxu0 0.0
        %928 = vmatpush1.xpose.msra.mxu0 0.0
        %929 = vmatprep.subr.mxu0 0.0
        %930 = vmatpush1.xpose.msra.mxu0 0.0
        %931 = vmatprep.subr.mxu0 0.0
        %932 = vmatpush1.xpose.msra.mxu0 0.0
        %933 = vmatprep.subr.mxu0 0.0
        %934 = vmatpush1.xpose.msra.mxu0 0.0
        %935 = vmatprep.subr.mxu0 0.0
        %936 = vmatpush1.xpose.msra.mxu0 0.0
        %937 = vmatprep.subr.mxu0 0.0
        %938 = vmatpush1.xpose.msra.mxu0 0.0
        %939 = vmatprep.subr.mxu0 0.0
        %940 = vmatpush1.xpose.msra.mxu0 0.0
        %941 = vmatprep.subr.mxu0 0.0
        %942 = vmatpush1.xpose.msra.mxu0 0.0
        %943 = vmatprep.mubr.f32.mxu0 0.0
        %944 = vmatmul.mubr.f32.gmra.mrb[0].mxu0 %v871
        %v945 = vpop.f32.mrb[0].mxu0
        %v946 = vadd.f32 %v769, %v945
        %v947 = vpop.f32.mrb[0].mxu0
        %948 = vmatprep.mubr.f32.mxu0 0.0
        %949 = vmatmul.mubr.f32.gmra.mrb[0].mxu0 %v873
        %v950 = vpop.f32.mrb[0].mxu0
        %v951 = vadd.f32 %v770, %v950
        %v952 = vpop.f32.mrb[0].mxu0
        %953 = vdwg.mxu0
        %956 = vrot.lane.b32.xlu0 %v684, 120
        %v957 = vpop.permute.xlu0 %956
        %958 = vrot.lane.b32.xlu0 %v689, 120
        %v959 = vpop.permute.xlu0 %958
        %v960 = vsel %vm781, %v684, 0
        %v962 = vsel %vm781, %v689, 0
        %v964 = vsel %vm781, %v957, 0
        %v966 = vsel %vm781, %v959, 0
        %968 = vmatprep.subr.mxu0 0.0
        %969 = vmatpush1.xpose.msra.mxu0 %v964
        %970 = vmatprep.subr.mxu0 0.0
        %971 = vmatpush1.xpose.msra.mxu0 %v966
        %972 = vmatprep.subr.mxu0 0.0
        %973 = vmatpush1.xpose.msra.mxu0 0.0
        %974 = vmatprep.subr.mxu0 0.0
        %975 = vmatpush1.xpose.msra.mxu0 0.0
        %976 = vmatprep.subr.mxu0 0.0
        %977 = vmatpush1.xpose.msra.mxu0 0.0
        %978 = vmatprep.subr.mxu0 0.0
        %979 = vmatpush1.xpose.msra.mxu0 0.0
        %980 = vmatprep.subr.mxu0 0.0
        %981 = vmatpush1.xpose.msra.mxu0 0.0
        %982 = vmatprep.subr.mxu0 0.0
        %983 = vmatpush1.xpose.msra.mxu0 0.0
        %984 = vmatprep.subr.mxu0 0.0
        %985 = vmatpush1.xpose.msra.mxu0 0.0
        %986 = vmatprep.subr.mxu0 0.0
        %987 = vmatpush1.xpose.msra.mxu0 0.0
        %988 = vmatprep.subr.mxu0 0.0
        %989 = vmatpush1.xpose.msra.mxu0 0.0
        %990 = vmatprep.subr.mxu0 0.0
        %991 = vmatpush1.xpose.msra.mxu0 0.0
        %992 = vmatprep.subr.mxu0 0.0
        %993 = vmatpush1.xpose.msra.mxu0 0.0
        %994 = vmatprep.subr.mxu0 0.0
        %995 = vmatpush1.xpose.msra.mxu0 0.0
        %996 = vmatprep.subr.mxu0 0.0
        %997 = vmatpush1.xpose.msra.mxu0 0.0
        %998 = vmatprep.subr.mxu0 0.0
        %999 = vmatpush1.xpose.msra.mxu0 0.0
        %1000 = vmatprep.subr.mxu0 0.0
        %1001 = vmatpush1.xpose.msra.mxu0 0.0
        %1002 = vmatprep.subr.mxu0 0.0
        %1003 = vmatpush1.xpose.msra.mxu0 0.0
        %1004 = vmatprep.subr.mxu0 0.0
        %1005 = vmatpush1.xpose.msra.mxu0 0.0
        %1006 = vmatprep.subr.mxu0 0.0
        %1007 = vmatpush1.xpose.msra.mxu0 0.0
        %1008 = vmatprep.subr.mxu0 0.0
        %1009 = vmatpush1.xpose.msra.mxu0 0.0
        %1010 = vmatprep.subr.mxu0 0.0
        %1011 = vmatpush1.xpose.msra.mxu0 0.0
        %1012 = vmatprep.subr.mxu0 0.0
        %1013 = vmatpush1.xpose.msra.mxu0 0.0
        %1014 = vmatprep.subr.mxu0 0.0
        %1015 = vmatpush1.xpose.msra.mxu0 0.0
        %1016 = vmatprep.subr.mxu0 0.0
        %1017 = vmatpush1.xpose.msra.mxu0 0.0
        %1018 = vmatprep.subr.mxu0 0.0
        %1019 = vmatpush1.xpose.msra.mxu0 0.0
        %1020 = vmatprep.subr.mxu0 0.0
        %1021 = vmatpush1.xpose.msra.mxu0 0.0
        %1022 = vmatprep.subr.mxu0 0.0
        %1023 = vmatpush1.xpose.msra.mxu0 0.0
        %1024 = vmatprep.subr.mxu0 0.0
        %1025 = vmatpush1.xpose.msra.mxu0 0.0
        %1026 = vmatprep.subr.mxu0 0.0
        %1027 = vmatpush1.xpose.msra.mxu0 0.0
        %1028 = vmatprep.subr.mxu0 0.0
        %1029 = vmatpush1.xpose.msra.mxu0 0.0
        %1030 = vmatprep.subr.mxu0 0.0
        %1031 = vmatpush1.xpose.msra.mxu0 0.0
        %1032 = vmatprep.mubr.f32.mxu0 0.0
        %1033 = vmatmul.mubr.f32.gmra.mrb[0].mxu0 %v960
        %v1034 = vpop.f32.mrb[0].mxu0
        %v1035 = vadd.f32 %v771, %v1034
        %v1036 = vpop.f32.mrb[0].mxu0
        %1037 = vmatprep.mubr.f32.mxu0 0.0
        %1038 = vmatmul.mubr.f32.gmra.mrb[0].mxu0 %v962
        %v1039 = vpop.f32.mrb[0].mxu0
        %v1040 = vadd.f32 %v772, %v1039
        %v1041 = vpop.f32.mrb[0].mxu0
        %1042 = vdwg.mxu0
        %1045 = vrot.lane.b32.xlu0 %v759, 120
        %v1046 = vpop.permute.xlu0 %1045
        %1047 = vrot.lane.b32.xlu0 %v764, 120
        %v1048 = vpop.permute.xlu0 %1047
        %v1049 = vsel %vm781, %v759, 0
        %v1051 = vsel %vm781, %v764, 0
        %v1053 = vsel %vm781, %v1046, 0
        %v1055 = vsel %vm781, %v1048, 0
        %1057 = vmatprep.subr.mxu0 0.0
        %1058 = vmatpush1.xpose.msra.mxu0 %v1053
        %1059 = vmatprep.subr.mxu0 0.0
        %1060 = vmatpush1.xpose.msra.mxu0 %v1055
        %1061 = vmatprep.subr.mxu0 0.0
        %1062 = vmatpush1.xpose.msra.mxu0 0.0
        %1063 = vmatprep.subr.mxu0 0.0
        %1064 = vmatpush1.xpose.msra.mxu0 0.0
        %1065 = vmatprep.subr.mxu0 0.0
        %1066 = vmatpush1.xpose.msra.mxu0 0.0
        %1067 = vmatprep.subr.mxu0 0.0
        %1068 = vmatpush1.xpose.msra.mxu0 0.0
        %1069 = vmatprep.subr.mxu0 0.0
        %1070 = vmatpush1.xpose.msra.mxu0 0.0
        %1071 = vmatprep.subr.mxu0 0.0
        %1072 = vmatpush1.xpose.msra.mxu0 0.0
        %1073 = vmatprep.subr.mxu0 0.0
        %1074 = vmatpush1.xpose.msra.mxu0 0.0
        %1075 = vmatprep.subr.mxu0 0.0
        %1076 = vmatpush1.xpose.msra.mxu0 0.0
        %1077 = vmatprep.subr.mxu0 0.0
        %1078 = vmatpush1.xpose.msra.mxu0 0.0
        %1079 = vmatprep.subr.mxu0 0.0
        %1080 = vmatpush1.xpose.msra.mxu0 0.0
        %1081 = vmatprep.subr.mxu0 0.0
        %1082 = vmatpush1.xpose.msra.mxu0 0.0
        %1083 = vmatprep.subr.mxu0 0.0
        %1084 = vmatpush1.xpose.msra.mxu0 0.0
        %1085 = vmatprep.subr.mxu0 0.0
        %1086 = vmatpush1.xpose.msra.mxu0 0.0
        %1087 = vmatprep.subr.mxu0 0.0
        %1088 = vmatpush1.xpose.msra.mxu0 0.0
        %1089 = vmatprep.subr.mxu0 0.0
        %1090 = vmatpush1.xpose.msra.mxu0 0.0
        %1091 = vmatprep.subr.mxu0 0.0
        %1092 = vmatpush1.xpose.msra.mxu0 0.0
        %1093 = vmatprep.subr.mxu0 0.0
        %1094 = vmatpush1.xpose.msra.mxu0 0.0
        %1095 = vmatprep.subr.mxu0 0.0
        %1096 = vmatpush1.xpose.msra.mxu0 0.0
        %1097 = vmatprep.subr.mxu0 0.0
        %1098 = vmatpush1.xpose.msra.mxu0 0.0
        %1099 = vmatprep.subr.mxu0 0.0
        %1100 = vmatpush1.xpose.msra.mxu0 0.0
        %1101 = vmatprep.subr.mxu0 0.0
        %1102 = vmatpush1.xpose.msra.mxu0 0.0
        %1103 = vmatprep.subr.mxu0 0.0
        %1104 = vmatpush1.xpose.msra.mxu0 0.0
        %1105 = vmatprep.subr.mxu0 0.0
        %1106 = vmatpush1.xpose.msra.mxu0 0.0
        %1107 = vmatprep.subr.mxu0 0.0
        %1108 = vmatpush1.xpose.msra.mxu0 0.0
        %1109 = vmatprep.subr.mxu0 0.0
        %1110 = vmatpush1.xpose.msra.mxu0 0.0
        %1111 = vmatprep.subr.mxu0 0.0
        %1112 = vmatpush1.xpose.msra.mxu0 0.0
        %1113 = vmatprep.subr.mxu0 0.0
        %1114 = vmatpush1.xpose.msra.mxu0 0.0
        %1115 = vmatprep.subr.mxu0 0.0
        %1116 = vmatpush1.xpose.msra.mxu0 0.0
        %1117 = vmatprep.subr.mxu0 0.0
        %1118 = vmatpush1.xpose.msra.mxu0 0.0
        %1119 = vmatprep.subr.mxu0 0.0
        %1120 = vmatpush1.xpose.msra.mxu0 0.0
        %1121 = vmatprep.mubr.f32.mxu0 0.0
        %1122 = vmatmul.mubr.f32.gmra.mrb[0].mxu0 %v1049
        %v1123 = vpop.f32.mrb[0].mxu0
        %v1124 = vadd.f32 %v773, %v1123
        %v1125 = vpop.f32.mrb[0].mxu0
        %1126 = vmatprep.mubr.f32.mxu0 0.0
        %1127 = vmatmul.mubr.f32.gmra.mrb[0].mxu0 %v1051
        %v1128 = vpop.f32.mrb[0].mxu0
        %v1129 = vadd.f32 %v774, %v1128
        %v1130 = vpop.f32.mrb[0].mxu0
        %1131 = vdwg.mxu0
        %vm1132 = vcmask 130048
        %v1133 = vsel %vm1132, %v857, -inf
        %1134 = vmax.xlane.f32.xlu0 %v1133
        %v1135 = vpop.xlane.xlu0 %1134
        %v1136 = vsel %vm1132, %v862, -inf
        %1137 = vmax.xlane.f32.xlu0 %v1136
        %v1138 = vpop.xlane.xlu0 %1137
        %v1139 = vsel %vm1132, %v946, -inf
        %1140 = vmax.xlane.f32.xlu0 %v1139
        %v1141 = vpop.xlane.xlu0 %1140
        %v1142 = vsel %vm1132, %v951, -inf
        %1143 = vmax.xlane.f32.xlu0 %v1142
        %v1144 = vpop.xlane.xlu0 %1143
        %v1145 = vsel %vm1132, %v1035, -inf
        %1146 = vmax.xlane.f32.xlu0 %v1145
        %v1147 = vpop.xlane.xlu0 %1146
        %v1148 = vsel %vm1132, %v1040, -inf
        %1149 = vmax.xlane.f32.xlu0 %v1148
        %v1150 = vpop.xlane.xlu0 %1149
        %v1151 = vsel %vm1132, %v1124, -inf
        %1152 = vmax.xlane.f32.xlu0 %v1151
        %v1153 = vpop.xlane.xlu0 %1152
        %v1154 = vsel %vm1132, %v1129, -inf
        %1155 = vmax.xlane.f32.xlu0 %v1154
        %v1156 = vpop.xlane.xlu0 %1155
        %v1157 = vsub.f32 %v857, %v1135
        %v1158 = vsub.f32 %v862, %v1138
        %v1159 = vsub.f32 %v946, %v1141
        %v1160 = vsub.f32 %v951, %v1144
        %v1161 = vsub.f32 %v1035, %v1147
        %v1162 = vsub.f32 %v1040, %v1150
        %v1163 = vsub.f32 %v1124, %v1153
        %v1164 = vsub.f32 %v1129, %v1156
        %v1165 = vmul.f32 %v1157, 1.442695
        %v1166 = vpow.pop %v1165
        %v1167 = vmul.f32 %v1158, 1.442695
        %v1168 = vpow.pop %v1167
        %v1169 = vmul.f32 %v1159, 1.442695
        %v1170 = vpow.pop %v1169
        %v1171 = vmul.f32 %v1160, 1.442695
        %v1172 = vpow.pop %v1171
        %v1173 = vmul.f32 %v1161, 1.442695
        %v1174 = vpow.pop %v1173
        %v1175 = vmul.f32 %v1162, 1.442695
        %v1176 = vpow.pop %v1175
        %v1177 = vmul.f32 %v1163, 1.442695
        %v1178 = vpow.pop %v1177
        %v1179 = vmul.f32 %v1164, 1.442695
        %v1180 = vpow.pop %v1179
        %v1181 = vsel %vm1132, %v1166, 0.0
        %1182 = vadd.xlane.f32.xlu0 %v1181
        %v1183 = vpop.xlane.xlu0 %1182
        %v1184 = vsel %vm1132, %v1168, 0.0
        %1185 = vadd.xlane.f32.xlu0 %v1184
        %v1186 = vpop.xlane.xlu0 %1185
        %v1187 = vsel %vm1132, %v1170, 0.0
        %1188 = vadd.xlane.f32.xlu0 %v1187
        %v1189 = vpop.xlane.xlu0 %1188
        %v1190 = vsel %vm1132, %v1172, 0.0
        %1191 = vadd.xlane.f32.xlu0 %v1190
        %v1192 = vpop.xlane.xlu0 %1191
        %v1193 = vsel %vm1132, %v1174, 0.0
        %1194 = vadd.xlane.f32.xlu0 %v1193
        %v1195 = vpop.xlane.xlu0 %1194
        %v1196 = vsel %vm1132, %v1176, 0.0
        %1197 = vadd.xlane.f32.xlu0 %v1196
        %v1198 = vpop.xlane.xlu0 %1197
        %v1199 = vsel %vm1132, %v1178, 0.0
        %1200 = vadd.xlane.f32.xlu0 %v1199
        %v1201 = vpop.xlane.xlu0 %1200
        %v1202 = vsel %vm1132, %v1180, 0.0
        %1203 = vadd.xlane.f32.xlu0 %v1202
        %v1204 = vpop.xlane.xlu0 %1203
        %v1205 = vrcp.pop %v1183
        %v1206 = vrcp.pop %v1186
        %v1207 = vrcp.pop %v1189
        %v1208 = vrcp.pop %v1192
        %v1209 = vrcp.pop %v1195
        %v1210 = vrcp.pop %v1198
        %v1211 = vrcp.pop %v1201
        %v1212 = vrcp.pop %v1204
        %v1213 = vmul.f32 %v1166, %v1205
        %v1214 = vmul.f32 %v1168, %v1206
        %v1215 = vmul.f32 %v1170, %v1207
        %v1216 = vmul.f32 %v1172, %v1208
        %v1217 = vmul.f32 %v1174, %v1209
        %v1218 = vmul.f32 %v1176, %v1210
        %v1219 = vmul.f32 %v1178, %v1211
        %v1220 = vmul.f32 %v1180, %v1212
        %1221 = vrot.lane.b32.xlu0 %v534, 112
        %v1222 = vpop.permute.xlu0 %1221
        %1223 = vrot.lane.b32.xlu0 %v539, 112
        %v1224 = vpop.permute.xlu0 %1223
        %v1228 = vsel %vm1132, %v1213, 0
        %v1231 = vsel %vm1132, %v1214, 0
        %1233 = vmatprep.subr.mxu0 0.0
        %1234 = vmatpush1.msra.mxu0 %v1222
        %1235 = vmatprep.subr.mxu0 0.0
        %1236 = vmatpush1.msra.mxu0 %v1224
        %1237 = vmatprep.subr.mxu0 0.0
        %1238 = vmatpush1.msra.mxu0 0.0
        %1239 = vmatprep.subr.mxu0 0.0
        %1240 = vmatpush1.msra.mxu0 0.0
        %1241 = vmatprep.subr.mxu0 0.0
        %1242 = vmatpush1.msra.mxu0 0.0
        %1243 = vmatprep.subr.mxu0 0.0
        %1244 = vmatpush1.msra.mxu0 0.0
        %1245 = vmatprep.subr.mxu0 0.0
        %1246 = vmatpush1.msra.mxu0 0.0
        %1247 = vmatprep.subr.mxu0 0.0
        %1248 = vmatpush1.msra.mxu0 0.0
        %1249 = vmatprep.subr.mxu0 0.0
        %1250 = vmatpush1.msra.mxu0 0.0
        %1251 = vmatprep.subr.mxu0 0.0
        %1252 = vmatpush1.msra.mxu0 0.0
        %1253 = vmatprep.subr.mxu0 0.0
        %1254 = vmatpush1.msra.mxu0 0.0
        %1255 = vmatprep.subr.mxu0 0.0
        %1256 = vmatpush1.msra.mxu0 0.0
        %1257 = vmatprep.subr.mxu0 0.0
        %1258 = vmatpush1.msra.mxu0 0.0
        %1259 = vmatprep.subr.mxu0 0.0
        %1260 = vmatpush1.msra.mxu0 0.0
        %1261 = vmatprep.subr.mxu0 0.0
        %1262 = vmatpush1.msra.mxu0 0.0
        %1263 = vmatprep.subr.mxu0 0.0
        %1264 = vmatpush1.msra.mxu0 0.0
        %1265 = vmatprep.subr.mxu0 0.0
        %1266 = vmatpush1.msra.mxu0 0.0
        %1267 = vmatprep.subr.mxu0 0.0
        %1268 = vmatpush1.msra.mxu0 0.0
        %1269 = vmatprep.subr.mxu0 0.0
        %1270 = vmatpush1.msra.mxu0 0.0
        %1271 = vmatprep.subr.mxu0 0.0
        %1272 = vmatpush1.msra.mxu0 0.0
        %1273 = vmatprep.subr.mxu0 0.0
        %1274 = vmatpush1.msra.mxu0 0.0
        %1275 = vmatprep.subr.mxu0 0.0
        %1276 = vmatpush1.msra.mxu0 0.0
        %1277 = vmatprep.subr.mxu0 0.0
        %1278 = vmatpush1.msra.mxu0 0.0
        %1279 = vmatprep.subr.mxu0 0.0
        %1280 = vmatpush1.msra.mxu0 0.0
        %1281 = vmatprep.subr.mxu0 0.0
        %1282 = vmatpush1.msra.mxu0 0.0
        %1283 = vmatprep.subr.mxu0 0.0
        %1284 = vmatpush1.msra.mxu0 0.0
        %1285 = vmatprep.subr.mxu0 0.0
        %1286 = vmatpush1.msra.mxu0 0.0
        %1287 = vmatprep.subr.mxu0 0.0
        %1288 = vmatpush1.msra.mxu0 0.0
        %1289 = vmatprep.subr.mxu0 0.0
        %1290 = vmatpush1.msra.mxu0 0.0
        %1291 = vmatprep.subr.mxu0 0.0
        %1292 = vmatpush1.msra.mxu0 0.0
        %1293 = vmatprep.subr.mxu0 0.0
        %1294 = vmatpush1.msra.mxu0 0.0
        %1295 = vmatprep.subr.mxu0 0.0
        %1296 = vmatpush1.msra.mxu0 0.0
        %1297 = vmatprep.mubr.f32.mxu0 0.0
        %1298 = vmatmul.mubr.f32.gmra.mrb[0].mxu0 %v1228
        %v1299 = vpop.f32.mrb[0].mxu0
        %v1300 = vadd.f32 0.0, %v1299
        %v1301 = vpop.f32.mrb[0].mxu0
        %1302 = vmatprep.mubr.f32.mxu0 0.0
        %1303 = vmatmul.mubr.f32.gmra.mrb[0].mxu0 %v1231
        %v1304 = vpop.f32.mrb[0].mxu0
        %v1305 = vadd.f32 0.0, %v1304
        %v1306 = vpop.f32.mrb[0].mxu0
        %1307 = vdwg.mxu0
        %1308 = vrot.lane.b32.xlu0 %v609, 112
        %v1309 = vpop.permute.xlu0 %1308
        %1310 = vrot.lane.b32.xlu0 %v614, 112
        %v1311 = vpop.permute.xlu0 %1310
        %v1315 = vsel %vm1132, %v1215, 0
        %v1318 = vsel %vm1132, %v1216, 0
        %1320 = vmatprep.subr.mxu0 0.0
        %1321 = vmatpush1.msra.mxu0 %v1309
        %1322 = vmatprep.subr.mxu0 0.0
        %1323 = vmatpush1.msra.mxu0 %v1311
        %1324 = vmatprep.subr.mxu0 0.0
        %1325 = vmatpush1.msra.mxu0 0.0
        %1326 = vmatprep.subr.mxu0 0.0
        %1327 = vmatpush1.msra.mxu0 0.0
        %1328 = vmatprep.subr.mxu0 0.0
        %1329 = vmatpush1.msra.mxu0 0.0
        %1330 = vmatprep.subr.mxu0 0.0
        %1331 = vmatpush1.msra.mxu0 0.0
        %1332 = vmatprep.subr.mxu0 0.0
        %1333 = vmatpush1.msra.mxu0 0.0
        %1334 = vmatprep.subr.mxu0 0.0
        %1335 = vmatpush1.msra.mxu0 0.0
        %1336 = vmatprep.subr.mxu0 0.0
        %1337 = vmatpush1.msra.mxu0 0.0
        %1338 = vmatprep.subr.mxu0 0.0
        %1339 = vmatpush1.msra.mxu0 0.0
        %1340 = vmatprep.subr.mxu0 0.0
        %1341 = vmatpush1.msra.mxu0 0.0
        %1342 = vmatprep.subr.mxu0 0.0
        %1343 = vmatpush1.msra.mxu0 0.0
        %1344 = vmatprep.subr.mxu0 0.0
        %1345 = vmatpush1.msra.mxu0 0.0
        %1346 = vmatprep.subr.mxu0 0.0
        %1347 = vmatpush1.msra.mxu0 0.0
        %1348 = vmatprep.subr.mxu0 0.0
        %1349 = vmatpush1.msra.mxu0 0.0
        %1350 = vmatprep.subr.mxu0 0.0
        %1351 = vmatpush1.msra.mxu0 0.0
        %1352 = vmatprep.subr.mxu0 0.0
        %1353 = vmatpush1.msra.mxu0 0.0
        %1354 = vmatprep.subr.mxu0 0.0
        %1355 = vmatpush1.msra.mxu0 0.0
        %1356 = vmatprep.subr.mxu0 0.0
        %1357 = vmatpush1.msra.mxu0 0.0
        %1358 = vmatprep.subr.mxu0 0.0
        %1359 = vmatpush1.msra.mxu0 0.0
        %1360 = vmatprep.subr.mxu0 0.0
        %1361 = vmatpush1.msra.mxu0 0.0
        %1362 = vmatprep.subr.mxu0 0.0
        %1363 = vmatpush1.msra.mxu0 0.0
        %1364 = vmatprep.subr.mxu0 0.0
        %1365 = vmatpush1.msra.mxu0 0.0
        %1366 = vmatprep.subr.mxu0 0.0
        %1367 = vmatpush1.msra.mxu0 0.0
        %1368 = vmatprep.subr.mxu0 0.0
        %1369 = vmatpush1.msra.mxu0 0.0
        %1370 = vmatprep.subr.mxu0 0.0
        %1371 = vmatpush1.msra.mxu0 0.0
        %1372 = vmatprep.subr.mxu0 0.0
        %1373 = vmatpush1.msra.mxu0 0.0
        %1374 = vmatprep.subr.mxu0 0.0
        %1375 = vmatpush1.msra.mxu0 0.0
        %1376 = vmatprep.subr.mxu0 0.0
        %1377 = vmatpush1.msra.mxu0 0.0
        %1378 = vmatprep.subr.mxu0 0.0
        %1379 = vmatpush1.msra.mxu0 0.0
        %1380 = vmatprep.subr.mxu0 0.0
        %1381 = vmatpush1.msra.mxu0 0.0
        %1382 = vmatprep.subr.mxu0 0.0
        %1383 = vmatpush1.msra.mxu0 0.0
        %1384 = vmatprep.mubr.f32.mxu0 0.0
        %1385 = vmatmul.mubr.f32.gmra.mrb[0].mxu0 %v1315
        %v1386 = vpop.f32.mrb[0].mxu0
        %v1387 = vadd.f32 0.0, %v1386
        %v1388 = vpop.f32.mrb[0].mxu0
        %1389 = vmatprep.mubr.f32.mxu0 0.0
        %1390 = vmatmul.mubr.f32.gmra.mrb[0].mxu0 %v1318
        %v1391 = vpop.f32.mrb[0].mxu0
        %v1392 = vadd.f32 0.0, %v1391
        %v1393 = vpop.f32.mrb[0].mxu0
        %1394 = vdwg.mxu0
        %1395 = vrot.lane.b32.xlu0 %v684, 112
        %v1396 = vpop.permute.xlu0 %1395
        %1397 = vrot.lane.b32.xlu0 %v689, 112
        %v1398 = vpop.permute.xlu0 %1397
        %v1402 = vsel %vm1132, %v1217, 0
        %v1405 = vsel %vm1132, %v1218, 0
        %1407 = vmatprep.subr.mxu0 0.0
        %1408 = vmatpush1.msra.mxu0 %v1396
        %1409 = vmatprep.subr.mxu0 0.0
        %1410 = vmatpush1.msra.mxu0 %v1398
        %1411 = vmatprep.subr.mxu0 0.0
        %1412 = vmatpush1.msra.mxu0 0.0
        %1413 = vmatprep.subr.mxu0 0.0
        %1414 = vmatpush1.msra.mxu0 0.0
        %1415 = vmatprep.subr.mxu0 0.0
        %1416 = vmatpush1.msra.mxu0 0.0
        %1417 = vmatprep.subr.mxu0 0.0
        %1418 = vmatpush1.msra.mxu0 0.0
        %1419 = vmatprep.subr.mxu0 0.0
        %1420 = vmatpush1.msra.mxu0 0.0
        %1421 = vmatprep.subr.mxu0 0.0
        %1422 = vmatpush1.msra.mxu0 0.0
        %1423 = vmatprep.subr.mxu0 0.0
        %1424 = vmatpush1.msra.mxu0 0.0
        %1425 = vmatprep.subr.mxu0 0.0
        %1426 = vmatpush1.msra.mxu0 0.0
        %1427 = vmatprep.subr.mxu0 0.0
        %1428 = vmatpush1.msra.mxu0 0.0
        %1429 = vmatprep.subr.mxu0 0.0
        %1430 = vmatpush1.msra.mxu0 0.0
        %1431 = vmatprep.subr.mxu0 0.0
        %1432 = vmatpush1.msra.mxu0 0.0
        %1433 = vmatprep.subr.mxu0 0.0
        %1434 = vmatpush1.msra.mxu0 0.0
        %1435 = vmatprep.subr.mxu0 0.0
        %1436 = vmatpush1.msra.mxu0 0.0
        %1437 = vmatprep.subr.mxu0 0.0
        %1438 = vmatpush1.msra.mxu0 0.0
        %1439 = vmatprep.subr.mxu0 0.0
        %1440 = vmatpush1.msra.mxu0 0.0
        %1441 = vmatprep.subr.mxu0 0.0
        %1442 = vmatpush1.msra.mxu0 0.0
        %1443 = vmatprep.subr.mxu0 0.0
        %1444 = vmatpush1.msra.mxu0 0.0
        %1445 = vmatprep.subr.mxu0 0.0
        %1446 = vmatpush1.msra.mxu0 0.0
        %1447 = vmatprep.subr.mxu0 0.0
        %1448 = vmatpush1.msra.mxu0 0.0
        %1449 = vmatprep.subr.mxu0 0.0
        %1450 = vmatpush1.msra.mxu0 0.0
        %1451 = vmatprep.subr.mxu0 0.0
        %1452 = vmatpush1.msra.mxu0 0.0
        %1453 = vmatprep.subr.mxu0 0.0
        %1454 = vmatpush1.msra.mxu0 0.0
        %1455 = vmatprep.subr.mxu0 0.0
        %1456 = vmatpush1.msra.mxu0 0.0
        %1457 = vmatprep.subr.mxu0 0.0
        %1458 = vmatpush1.msra.mxu0 0.0
        %1459 = vmatprep.subr.mxu0 0.0
        %1460 = vmatpush1.msra.mxu0 0.0
        %1461 = vmatprep.subr.mxu0 0.0
        %1462 = vmatpush1.msra.mxu0 0.0
        %1463 = vmatprep.subr.mxu0 0.0
        %1464 = vmatpush1.msra.mxu0 0.0
        %1465 = vmatprep.subr.mxu0 0.0
        %1466 = vmatpush1.msra.mxu0 0.0
        %1467 = vmatprep.subr.mxu0 0.0
        %1468 = vmatpush1.msra.mxu0 0.0
        %1469 = vmatprep.subr.mxu0 0.0
        %1470 = vmatpush1.msra.mxu0 0.0
        %1471 = vmatprep.mubr.f32.mxu0 0.0
        %1472 = vmatmul.mubr.f32.gmra.mrb[0].mxu0 %v1402
        %v1473 = vpop.f32.mrb[0].mxu0
        %v1474 = vadd.f32 0.0, %v1473
        %v1475 = vpop.f32.mrb[0].mxu0
        %1476 = vmatprep.mubr.f32.mxu0 0.0
        %1477 = vmatmul.mubr.f32.gmra.mrb[0].mxu0 %v1405
        %v1478 = vpop.f32.mrb[0].mxu0
        %v1479 = vadd.f32 0.0, %v1478
        %v1480 = vpop.f32.mrb[0].mxu0
        %1481 = vdwg.mxu0
        %1482 = vrot.lane.b32.xlu0 %v759, 112
        %v1483 = vpop.permute.xlu0 %1482
        %1484 = vrot.lane.b32.xlu0 %v764, 112
        %v1485 = vpop.permute.xlu0 %1484
        %v1489 = vsel %vm1132, %v1219, 0
        %v1492 = vsel %vm1132, %v1220, 0
        %1494 = vmatprep.subr.mxu0 0.0
        %1495 = vmatpush1.msra.mxu0 %v1483
        %1496 = vmatprep.subr.mxu0 0.0
        %1497 = vmatpush1.msra.mxu0 %v1485
        %1498 = vmatprep.subr.mxu0 0.0
        %1499 = vmatpush1.msra.mxu0 0.0
        %1500 = vmatprep.subr.mxu0 0.0
        %1501 = vmatpush1.msra.mxu0 0.0
        %1502 = vmatprep.subr.mxu0 0.0
        %1503 = vmatpush1.msra.mxu0 0.0
        %1504 = vmatprep.subr.mxu0 0.0
        %1505 = vmatpush1.msra.mxu0 0.0
        %1506 = vmatprep.subr.mxu0 0.0
        %1507 = vmatpush1.msra.mxu0 0.0
        %1508 = vmatprep.subr.mxu0 0.0
        %1509 = vmatpush1.msra.mxu0 0.0
        %1510 = vmatprep.subr.mxu0 0.0
        %1511 = vmatpush1.msra.mxu0 0.0
        %1512 = vmatprep.subr.mxu0 0.0
        %1513 = vmatpush1.msra.mxu0 0.0
        %1514 = vmatprep.subr.mxu0 0.0
        %1515 = vmatpush1.msra.mxu0 0.0
        %1516 = vmatprep.subr.mxu0 0.0
        %1517 = vmatpush1.msra.mxu0 0.0
        %1518 = vmatprep.subr.mxu0 0.0
        %1519 = vmatpush1.msra.mxu0 0.0
        %1520 = vmatprep.subr.mxu0 0.0
        %1521 = vmatpush1.msra.mxu0 0.0
        %1522 = vmatprep.subr.mxu0 0.0
        %1523 = vmatpush1.msra.mxu0 0.0
        %1524 = vmatprep.subr.mxu0 0.0
        %1525 = vmatpush1.msra.mxu0 0.0
        %1526 = vmatprep.subr.mxu0 0.0
        %1527 = vmatpush1.msra.mxu0 0.0
        %1528 = vmatprep.subr.mxu0 0.0
        %1529 = vmatpush1.msra.mxu0 0.0
        %1530 = vmatprep.subr.mxu0 0.0
        %1531 = vmatpush1.msra.mxu0 0.0
        %1532 = vmatprep.subr.mxu0 0.0
        %1533 = vmatpush1.msra.mxu0 0.0
        %1534 = vmatprep.subr.mxu0 0.0
        %1535 = vmatpush1.msra.mxu0 0.0
        %1536 = vmatprep.subr.mxu0 0.0
        %1537 = vmatpush1.msra.mxu0 0.0
        %1538 = vmatprep.subr.mxu0 0.0
        %1539 = vmatpush1.msra.mxu0 0.0
        %1540 = vmatprep.subr.mxu0 0.0
        %1541 = vmatpush1.msra.mxu0 0.0
        %1542 = vmatprep.subr.mxu0 0.0
        %1543 = vmatpush1.msra.mxu0 0.0
        %1544 = vmatprep.subr.mxu0 0.0
        %1545 = vmatpush1.msra.mxu0 0.0
        %1546 = vmatprep.subr.mxu0 0.0
        %1547 = vmatpush1.msra.mxu0 0.0
        %1548 = vmatprep.subr.mxu0 0.0
        %1549 = vmatpush1.msra.mxu0 0.0
        %1550 = vmatprep.subr.mxu0 0.0
        %1551 = vmatpush1.msra.mxu0 0.0
        %1552 = vmatprep.subr.mxu0 0.0
        %1553 = vmatpush1.msra.mxu0 0.0
        %1554 = vmatprep.subr.mxu0 0.0
        %1555 = vmatpush1.msra.mxu0 0.0
        %1556 = vmatprep.subr.mxu0 0.0
        %1557 = vmatpush1.msra.mxu0 0.0
        %1558 = vmatprep.mubr.f32.mxu0 0.0
        %1559 = vmatmul.mubr.f32.gmra.mrb[0].mxu0 %v1489
        %v1560 = vpop.f32.mrb[0].mxu0
        %v1561 = vadd.f32 0.0, %v1560
        %v1562 = vpop.f32.mrb[0].mxu0
        %1563 = vmatprep.mubr.f32.mxu0 0.0
        %1564 = vmatmul.mubr.f32.gmra.mrb[0].mxu0 %v1492
        %v1565 = vpop.f32.mrb[0].mxu0
        %v1566 = vadd.f32 0.0, %v1565
        %v1567 = vpop.f32.mrb[0].mxu0
        %1568 = vdwg.mxu0
        %v1569 = vld [vmem:[%s393] sm:$0xff]
        %v1570 = vld [vmem:[%s393 + $0x8] sm:$0xff]
        %v1571 = vld [vmem:[%s393 + $0x10] sm:$0xff]
        %v1572 = vld [vmem:[%s393 + $0x18] sm:$0xff]
        %v1574 = vsel %vm781, %v1300, 0
        %v1577 = vsel %vm781, %v1305, 0
        %1579 = vmatprep.subr.mxu0 0.0
        %1580 = vmatpush1.msra.mxu0 %v1569
        %1581 = vmatprep.subr.mxu0 0.0
        %1582 = vmatpush1.msra.mxu0 0.0
        %1583 = vmatprep.subr.mxu0 0.0
        %1584 = vmatpush1.msra.mxu0 0.0
        %1585 = vmatprep.subr.mxu0 0.0
        %1586 = vmatpush1.msra.mxu0 0.0
        %1587 = vmatprep.subr.mxu0 0.0
        %1588 = vmatpush1.msra.mxu0 0.0
        %1589 = vmatprep.subr.mxu0 0.0
        %1590 = vmatpush1.msra.mxu0 0.0
        %1591 = vmatprep.subr.mxu0 0.0
        %1592 = vmatpush1.msra.mxu0 0.0
        %1593 = vmatprep.subr.mxu0 0.0
        %1594 = vmatpush1.msra.mxu0 0.0
        %1595 = vmatprep.subr.mxu0 0.0
        %1596 = vmatpush1.msra.mxu0 0.0
        %1597 = vmatprep.subr.mxu0 0.0
        %1598 = vmatpush1.msra.mxu0 0.0
        %1599 = vmatprep.subr.mxu0 0.0
        %1600 = vmatpush1.msra.mxu0 0.0
        %1601 = vmatprep.subr.mxu0 0.0
        %1602 = vmatpush1.msra.mxu0 0.0
        %1603 = vmatprep.subr.mxu0 0.0
        %1604 = vmatpush1.msra.mxu0 0.0
        %1605 = vmatprep.subr.mxu0 0.0
        %1606 = vmatpush1.msra.mxu0 0.0
        %1607 = vmatprep.subr.mxu0 0.0
        %1608 = vmatpush1.msra.mxu0 0.0
        %1609 = vmatprep.subr.mxu0 0.0
        %1610 = vmatpush1.msra.mxu0 0.0
        %1611 = vmatprep.subr.mxu0 0.0
        %1612 = vmatpush1.msra.mxu0 0.0
        %1613 = vmatprep.subr.mxu0 0.0
        %1614 = vmatpush1.msra.mxu0 0.0
        %1615 = vmatprep.subr.mxu0 0.0
        %1616 = vmatpush1.msra.mxu0 0.0
        %1617 = vmatprep.subr.mxu0 0.0
        %1618 = vmatpush1.msra.mxu0 0.0
        %1619 = vmatprep.subr.mxu0 0.0
        %1620 = vmatpush1.msra.mxu0 0.0
        %1621 = vmatprep.subr.mxu0 0.0
        %1622 = vmatpush1.msra.mxu0 0.0
        %1623 = vmatprep.subr.mxu0 0.0
        %1624 = vmatpush1.msra.mxu0 0.0
        %1625 = vmatprep.subr.mxu0 0.0
        %1626 = vmatpush1.msra.mxu0 0.0
        %1627 = vmatprep.subr.mxu0 0.0
        %1628 = vmatpush1.msra.mxu0 0.0
        %1629 = vmatprep.subr.mxu0 0.0
        %1630 = vmatpush1.msra.mxu0 0.0
        %1631 = vmatprep.subr.mxu0 0.0
        %1632 = vmatpush1.msra.mxu0 0.0
        %1633 = vmatprep.subr.mxu0 0.0
        %1634 = vmatpush1.msra.mxu0 0.0
        %1635 = vmatprep.subr.mxu0 0.0
        %1636 = vmatpush1.msra.mxu0 0.0
        %1637 = vmatprep.subr.mxu0 0.0
        %1638 = vmatpush1.msra.mxu0 0.0
        %1639 = vmatprep.subr.mxu0 0.0
        %1640 = vmatpush1.msra.mxu0 0.0
        %1641 = vmatprep.subr.mxu0 0.0
        %1642 = vmatpush1.msra.mxu0 0.0
        %1643 = vmatprep.mubr.f32.mxu0 0.0
        %1644 = vmatmul.mubr.f32.gmra.mrb[0].mxu0 %v1574
        %v1645 = vpop.f32.mrb[0].mxu0
        %v1646 = vadd.f32 0.0, %v1645
        %v1647 = vpop.f32.mrb[0].mxu0
        %1648 = vmatprep.mubr.f32.mxu0 0.0
        %1649 = vmatmul.mubr.f32.gmra.mrb[0].mxu0 %v1577
        %v1650 = vpop.f32.mrb[0].mxu0
        %v1651 = vadd.f32 0.0, %v1650
        %v1652 = vpop.f32.mrb[0].mxu0
        %1653 = vdwg.mxu0
        %v1655 = vsel %vm781, %v1387, 0
        %v1658 = vsel %vm781, %v1392, 0
        %1660 = vmatprep.subr.mxu0 0.0
        %1661 = vmatpush1.msra.mxu0 %v1570
        %1662 = vmatprep.subr.mxu0 0.0
        %1663 = vmatpush1.msra.mxu0 0.0
        %1664 = vmatprep.subr.mxu0 0.0
        %1665 = vmatpush1.msra.mxu0 0.0
        %1666 = vmatprep.subr.mxu0 0.0
        %1667 = vmatpush1.msra.mxu0 0.0
        %1668 = vmatprep.subr.mxu0 0.0
        %1669 = vmatpush1.msra.mxu0 0.0
        %1670 = vmatprep.subr.mxu0 0.0
        %1671 = vmatpush1.msra.mxu0 0.0
        %1672 = vmatprep.subr.mxu0 0.0
        %1673 = vmatpush1.msra.mxu0 0.0
        %1674 = vmatprep.subr.mxu0 0.0
        %1675 = vmatpush1.msra.mxu0 0.0
        %1676 = vmatprep.subr.mxu0 0.0
        %1677 = vmatpush1.msra.mxu0 0.0
        %1678 = vmatprep.subr.mxu0 0.0
        %1679 = vmatpush1.msra.mxu0 0.0
        %1680 = vmatprep.subr.mxu0 0.0
        %1681 = vmatpush1.msra.mxu0 0.0
        %1682 = vmatprep.subr.mxu0 0.0
        %1683 = vmatpush1.msra.mxu0 0.0
        %1684 = vmatprep.subr.mxu0 0.0
        %1685 = vmatpush1.msra.mxu0 0.0
        %1686 = vmatprep.subr.mxu0 0.0
        %1687 = vmatpush1.msra.mxu0 0.0
        %1688 = vmatprep.subr.mxu0 0.0
        %1689 = vmatpush1.msra.mxu0 0.0
        %1690 = vmatprep.subr.mxu0 0.0
        %1691 = vmatpush1.msra.mxu0 0.0
        %1692 = vmatprep.subr.mxu0 0.0
        %1693 = vmatpush1.msra.mxu0 0.0
        %1694 = vmatprep.subr.mxu0 0.0
        %1695 = vmatpush1.msra.mxu0 0.0
        %1696 = vmatprep.subr.mxu0 0.0
        %1697 = vmatpush1.msra.mxu0 0.0
        %1698 = vmatprep.subr.mxu0 0.0
        %1699 = vmatpush1.msra.mxu0 0.0
        %1700 = vmatprep.subr.mxu0 0.0
        %1701 = vmatpush1.msra.mxu0 0.0
        %1702 = vmatprep.subr.mxu0 0.0
        %1703 = vmatpush1.msra.mxu0 0.0
        %1704 = vmatprep.subr.mxu0 0.0
        %1705 = vmatpush1.msra.mxu0 0.0
        %1706 = vmatprep.subr.mxu0 0.0
        %1707 = vmatpush1.msra.mxu0 0.0
        %1708 = vmatprep.subr.mxu0 0.0
        %1709 = vmatpush1.msra.mxu0 0.0
        %1710 = vmatprep.subr.mxu0 0.0
        %1711 = vmatpush1.msra.mxu0 0.0
        %1712 = vmatprep.subr.mxu0 0.0
        %1713 = vmatpush1.msra.mxu0 0.0
        %1714 = vmatprep.subr.mxu0 0.0
        %1715 = vmatpush1.msra.mxu0 0.0
        %1716 = vmatprep.subr.mxu0 0.0
        %1717 = vmatpush1.msra.mxu0 0.0
        %1718 = vmatprep.subr.mxu0 0.0
        %1719 = vmatpush1.msra.mxu0 0.0
        %1720 = vmatprep.subr.mxu0 0.0
        %1721 = vmatpush1.msra.mxu0 0.0
        %1722 = vmatprep.subr.mxu0 0.0
        %1723 = vmatpush1.msra.mxu0 0.0
        %1724 = vmatprep.mubr.f32.mxu0 0.0
        %1725 = vmatmul.mubr.f32.gmra.mrb[0].mxu0 %v1655
        %v1726 = vpop.f32.mrb[0].mxu0
        %v1727 = vadd.f32 0.0, %v1726
        %v1728 = vpop.f32.mrb[0].mxu0
        %1729 = vmatprep.mubr.f32.mxu0 0.0
        %1730 = vmatmul.mubr.f32.gmra.mrb[0].mxu0 %v1658
        %v1731 = vpop.f32.mrb[0].mxu0
        %v1732 = vadd.f32 0.0, %v1731
        %v1733 = vpop.f32.mrb[0].mxu0
        %1734 = vdwg.mxu0
        %v1736 = vsel %vm781, %v1474, 0
        %v1739 = vsel %vm781, %v1479, 0
        %1741 = vmatprep.subr.mxu0 0.0
        %1742 = vmatpush1.msra.mxu0 %v1571
        %1743 = vmatprep.subr.mxu0 0.0
        %1744 = vmatpush1.msra.mxu0 0.0
        %1745 = vmatprep.subr.mxu0 0.0
        %1746 = vmatpush1.msra.mxu0 0.0
        %1747 = vmatprep.subr.mxu0 0.0
        %1748 = vmatpush1.msra.mxu0 0.0
        %1749 = vmatprep.subr.mxu0 0.0
        %1750 = vmatpush1.msra.mxu0 0.0
        %1751 = vmatprep.subr.mxu0 0.0
        %1752 = vmatpush1.msra.mxu0 0.0
        %1753 = vmatprep.subr.mxu0 0.0
        %1754 = vmatpush1.msra.mxu0 0.0
        %1755 = vmatprep.subr.mxu0 0.0
        %1756 = vmatpush1.msra.mxu0 0.0
        %1757 = vmatprep.subr.mxu0 0.0
        %1758 = vmatpush1.msra.mxu0 0.0
        %1759 = vmatprep.subr.mxu0 0.0
        %1760 = vmatpush1.msra.mxu0 0.0
        %1761 = vmatprep.subr.mxu0 0.0
        %1762 = vmatpush1.msra.mxu0 0.0
        %1763 = vmatprep.subr.mxu0 0.0
        %1764 = vmatpush1.msra.mxu0 0.0
        %1765 = vmatprep.subr.mxu0 0.0
        %1766 = vmatpush1.msra.mxu0 0.0
        %1767 = vmatprep.subr.mxu0 0.0
        %1768 = vmatpush1.msra.mxu0 0.0
        %1769 = vmatprep.subr.mxu0 0.0
        %1770 = vmatpush1.msra.mxu0 0.0
        %1771 = vmatprep.subr.mxu0 0.0
        %1772 = vmatpush1.msra.mxu0 0.0
        %1773 = vmatprep.subr.mxu0 0.0
        %1774 = vmatpush1.msra.mxu0 0.0
        %1775 = vmatprep.subr.mxu0 0.0
        %1776 = vmatpush1.msra.mxu0 0.0
        %1777 = vmatprep.subr.mxu0 0.0
        %1778 = vmatpush1.msra.mxu0 0.0
        %1779 = vmatprep.subr.mxu0 0.0
        %1780 = vmatpush1.msra.mxu0 0.0
        %1781 = vmatprep.subr.mxu0 0.0
        %1782 = vmatpush1.msra.mxu0 0.0
        %1783 = vmatprep.subr.mxu0 0.0
        %1784 = vmatpush1.msra.mxu0 0.0
        %1785 = vmatprep.subr.mxu0 0.0
        %1786 = vmatpush1.msra.mxu0 0.0
        %1787 = vmatprep.subr.mxu0 0.0
        %1788 = vmatpush1.msra.mxu0 0.0
        %1789 = vmatprep.subr.mxu0 0.0
        %1790 = vmatpush1.msra.mxu0 0.0
        %1791 = vmatprep.subr.mxu0 0.0
        %1792 = vmatpush1.msra.mxu0 0.0
        %1793 = vmatprep.subr.mxu0 0.0
        %1794 = vmatpush1.msra.mxu0 0.0
        %1795 = vmatprep.subr.mxu0 0.0
        %1796 = vmatpush1.msra.mxu0 0.0
        %1797 = vmatprep.subr.mxu0 0.0
        %1798 = vmatpush1.msra.mxu0 0.0
        %1799 = vmatprep.subr.mxu0 0.0
        %1800 = vmatpush1.msra.mxu0 0.0
        %1801 = vmatprep.subr.mxu0 0.0
        %1802 = vmatpush1.msra.mxu0 0.0
        %1803 = vmatprep.subr.mxu0 0.0
        %1804 = vmatpush1.msra.mxu0 0.0
        %1805 = vmatprep.mubr.f32.mxu0 0.0
        %1806 = vmatmul.mubr.f32.gmra.mrb[0].mxu0 %v1736
        %v1807 = vpop.f32.mrb[0].mxu0
        %v1808 = vadd.f32 0.0, %v1807
        %v1809 = vpop.f32.mrb[0].mxu0
        %1810 = vmatprep.mubr.f32.mxu0 0.0
        %1811 = vmatmul.mubr.f32.gmra.mrb[0].mxu0 %v1739
        %v1812 = vpop.f32.mrb[0].mxu0
        %v1813 = vadd.f32 0.0, %v1812
        %v1814 = vpop.f32.mrb[0].mxu0
        %1815 = vdwg.mxu0
        %v1817 = vsel %vm781, %v1561, 0
        %v1820 = vsel %vm781, %v1566, 0
        %1822 = vmatprep.subr.mxu0 0.0
        %1823 = vmatpush1.msra.mxu0 %v1572
        %1824 = vmatprep.subr.mxu0 0.0
        %1825 = vmatpush1.msra.mxu0 0.0
        %1826 = vmatprep.subr.mxu0 0.0
        %1827 = vmatpush1.msra.mxu0 0.0
        %1828 = vmatprep.subr.mxu0 0.0
        %1829 = vmatpush1.msra.mxu0 0.0
        %1830 = vmatprep.subr.mxu0 0.0
        %1831 = vmatpush1.msra.mxu0 0.0
        %1832 = vmatprep.subr.mxu0 0.0
        %1833 = vmatpush1.msra.mxu0 0.0
        %1834 = vmatprep.subr.mxu0 0.0
        %1835 = vmatpush1.msra.mxu0 0.0
        %1836 = vmatprep.subr.mxu0 0.0
        %1837 = vmatpush1.msra.mxu0 0.0
        %1838 = vmatprep.subr.mxu0 0.0
        %1839 = vmatpush1.msra.mxu0 0.0
        %1840 = vmatprep.subr.mxu0 0.0
        %1841 = vmatpush1.msra.mxu0 0.0
        %1842 = vmatprep.subr.mxu0 0.0
        %1843 = vmatpush1.msra.mxu0 0.0
        %1844 = vmatprep.subr.mxu0 0.0
        %1845 = vmatpush1.msra.mxu0 0.0
        %1846 = vmatprep.subr.mxu0 0.0
        %1847 = vmatpush1.msra.mxu0 0.0
        %1848 = vmatprep.subr.mxu0 0.0
        %1849 = vmatpush1.msra.mxu0 0.0
        %1850 = vmatprep.subr.mxu0 0.0
        %1851 = vmatpush1.msra.mxu0 0.0
        %1852 = vmatprep.subr.mxu0 0.0
        %1853 = vmatpush1.msra.mxu0 0.0
        %1854 = vmatprep.subr.mxu0 0.0
        %1855 = vmatpush1.msra.mxu0 0.0
        %1856 = vmatprep.subr.mxu0 0.0
        %1857 = vmatpush1.msra.mxu0 0.0
        %1858 = vmatprep.subr.mxu0 0.0
        %1859 = vmatpush1.msra.mxu0 0.0
        %1860 = vmatprep.subr.mxu0 0.0
        %1861 = vmatpush1.msra.mxu0 0.0
        %1862 = vmatprep.subr.mxu0 0.0
        %1863 = vmatpush1.msra.mxu0 0.0
        %1864 = vmatprep.subr.mxu0 0.0
        %1865 = vmatpush1.msra.mxu0 0.0
        %1866 = vmatprep.subr.mxu0 0.0
        %1867 = vmatpush1.msra.mxu0 0.0
        %1868 = vmatprep.subr.mxu0 0.0
        %1869 = vmatpush1.msra.mxu0 0.0
        %1870 = vmatprep.subr.mxu0 0.0
        %1871 = vmatpush1.msra.mxu0 0.0
        %1872 = vmatprep.subr.mxu0 0.0
        %1873 = vmatpush1.msra.mxu0 0.0
        %1874 = vmatprep.subr.mxu0 0.0
        %1875 = vmatpush1.msra.mxu0 0.0
        %1876 = vmatprep.subr.mxu0 0.0
        %1877 = vmatpush1.msra.mxu0 0.0
        %1878 = vmatprep.subr.mxu0 0.0
        %1879 = vmatpush1.msra.mxu0 0.0
        %1880 = vmatprep.subr.mxu0 0.0
        %1881 = vmatpush1.msra.mxu0 0.0
        %1882 = vmatprep.subr.mxu0 0.0
        %1883 = vmatpush1.msra.mxu0 0.0
        %1884 = vmatprep.subr.mxu0 0.0
        %1885 = vmatpush1.msra.mxu0 0.0
        %1886 = vmatprep.mubr.f32.mxu0 0.0
        %1887 = vmatmul.mubr.f32.gmra.mrb[0].mxu0 %v1817
        %v1888 = vpop.f32.mrb[0].mxu0
        %v1889 = vadd.f32 0.0, %v1888
        %v1890 = vpop.f32.mrb[0].mxu0
        %1891 = vmatprep.mubr.f32.mxu0 0.0
        %1892 = vmatmul.mubr.f32.gmra.mrb[0].mxu0 %v1820
        %v1893 = vpop.f32.mrb[0].mxu0
        %v1894 = vadd.f32 0.0, %v1893
        %v1895 = vpop.f32.mrb[0].mxu0
        %1896 = vdwg.mxu0
        %v1897 = vsel %vm421, %v1646, 0.0
        %v1898 = vsel %vm421, %v1727, 0.0
        %v1899 = vadd.f32 %v1897, %v1898
        %v1900 = vsel %vm421, %v1808, 0.0
        %v1901 = vadd.f32 %v1899, %v1900
        %v1902 = vsel %vm421, %v1889, 0.0
        %v1903 = vadd.f32 %v1901, %v1902
        %v1904 = vsel %vm421, %v1651, 0.0
        %v1905 = vsel %vm421, %v1732, 0.0
        %v1906 = vadd.f32 %v1904, %v1905
        %v1907 = vsel %vm421, %v1813, 0.0
        %v1908 = vadd.f32 %v1906, %v1907
        %v1909 = vsel %vm421, %v1894, 0.0
        %v1910 = vadd.f32 %v1908, %v1909
        %v1911 = vadd.f32 %v416, %v1903
        %v1912 = vadd.f32 %v417, %v1910
        %v1913 = vld [vmem:[%s396] sm:$0x1]
        %v1914 = vmul.f32 %v1911, %v1911
        %v1915 = vmul.f32 %v1912, %v1912
        %v1916 = vsel %vm421, %v1914, 0.0
        %1917 = vadd.xlane.f32.xlu0 %v1916
        %v1918 = vpop.xlane.xlu0 %1917
        %v1919 = vsel %vm421, %v1915, 0.0
        %1920 = vadd.xlane.f32.xlu0 %v1919
        %v1921 = vpop.xlane.xlu0 %1920
        %v1922 = vmul.f32 %v1918, %v428
        %v1923 = vmul.f32 %v1921, %v428
        %v1924 = vadd.f32 %v1922, 1e-06
        %v1925 = vadd.f32 %v1923, 1e-06
        %v1926 = vrsqrt.pop %v1924
        %v1927 = vrsqrt.pop %v1925
        %v1928 = vmul.f32 %v1911, %v1926
        %v1929 = vmul.f32 %v1912, %v1927
        %v1931 = vlaneseq
        %v1932 = vshrl.u32 %v1931, 7
        %v1933 = vsub.s32 0, %v1932
        %v1934 = vrot.slane %v1913, %v1933
        %v1936 = vmul.f32 %v1928, %v1934
        %v1937 = vmul.f32 %v1929, %v1934
        %v1938 = vld [vmem:[%s401] sm:$0xff]
        %v1939 = vld [vmem:[%s401 + $0x8] sm:$0xff]
        %v1940 = vld [vmem:[%s401 + $0x10] sm:$0xff]
        %v1941 = vld [vmem:[%s401 + $0x18] sm:$0xff]
        %v1943 = vsel %vm421, %v1936, 0
        %v1946 = vsel %vm421, %v1937, 0
        %1948 = vmatprep.subr.mxu0 0.0
        %1949 = vmatpush1.msra.mxu0 %v1938
        %1950 = vmatprep.subr.mxu0 0.0
        %1951 = vmatpush1.msra.mxu0 %v1939
        %1952 = vmatprep.subr.mxu0 0.0
        %1953 = vmatpush1.msra.mxu0 %v1940
        %1954 = vmatprep.subr.mxu0 0.0
        %1955 = vmatpush1.msra.mxu0 %v1941
        %1956 = vmatprep.subr.mxu0 0.0
        %1957 = vmatpush1.msra.mxu0 0.0
        %1958 = vmatprep.subr.mxu0 0.0
        %1959 = vmatpush1.msra.mxu0 0.0
        %1960 = vmatprep.subr.mxu0 0.0
        %1961 = vmatpush1.msra.mxu0 0.0
        %1962 = vmatprep.subr.mxu0 0.0
        %1963 = vmatpush1.msra.mxu0 0.0
        %1964 = vmatprep.subr.mxu0 0.0
        %1965 = vmatpush1.msra.mxu0 0.0
        %1966 = vmatprep.subr.mxu0 0.0
        %1967 = vmatpush1.msra.mxu0 0.0
        %1968 = vmatprep.subr.mxu0 0.0
        %1969 = vmatpush1.msra.mxu0 0.0
        %1970 = vmatprep.subr.mxu0 0.0
        %1971 = vmatpush1.msra.mxu0 0.0
        %1972 = vmatprep.subr.mxu0 0.0
        %1973 = vmatpush1.msra.mxu0 0.0
        %1974 = vmatprep.subr.mxu0 0.0
        %1975 = vmatpush1.msra.mxu0 0.0
        %1976 = vmatprep.subr.mxu0 0.0
        %1977 = vmatpush1.msra.mxu0 0.0
        %1978 = vmatprep.subr.mxu0 0.0
        %1979 = vmatpush1.msra.mxu0 0.0
        %1980 = vmatprep.subr.mxu0 0.0
        %1981 = vmatpush1.msra.mxu0 0.0
        %1982 = vmatprep.subr.mxu0 0.0
        %1983 = vmatpush1.msra.mxu0 0.0
        %1984 = vmatprep.subr.mxu0 0.0
        %1985 = vmatpush1.msra.mxu0 0.0
        %1986 = vmatprep.subr.mxu0 0.0
        %1987 = vmatpush1.msra.mxu0 0.0
        %1988 = vmatprep.subr.mxu0 0.0
        %1989 = vmatpush1.msra.mxu0 0.0
        %1990 = vmatprep.subr.mxu0 0.0
        %1991 = vmatpush1.msra.mxu0 0.0
        %1992 = vmatprep.subr.mxu0 0.0
        %1993 = vmatpush1.msra.mxu0 0.0
        %1994 = vmatprep.subr.mxu0 0.0
        %1995 = vmatpush1.msra.mxu0 0.0
        %1996 = vmatprep.subr.mxu0 0.0
        %1997 = vmatpush1.msra.mxu0 0.0
        %1998 = vmatprep.subr.mxu0 0.0
        %1999 = vmatpush1.msra.mxu0 0.0
        %2000 = vmatprep.subr.mxu0 0.0
        %2001 = vmatpush1.msra.mxu0 0.0
        %2002 = vmatprep.subr.mxu0 0.0
        %2003 = vmatpush1.msra.mxu0 0.0
        %2004 = vmatprep.subr.mxu0 0.0
        %2005 = vmatpush1.msra.mxu0 0.0
        %2006 = vmatprep.subr.mxu0 0.0
        %2007 = vmatpush1.msra.mxu0 0.0
        %2008 = vmatprep.subr.mxu0 0.0
        %2009 = vmatpush1.msra.mxu0 0.0
        %2010 = vmatprep.subr.mxu0 0.0
        %2011 = vmatpush1.msra.mxu0 0.0
        %2012 = vmatprep.mubr.f32.mxu0 0.0
        %2013 = vmatmul.mubr.f32.gmra.mrb[0].mxu0 %v1943
        %v2014 = vpop.f32.mrb[0].mxu0
        %v2015 = vadd.f32 0.0, %v2014
        %v2016 = vpop.f32.mrb[0].mxu0
        %2017 = vmatprep.mubr.f32.mxu0 0.0
        %2018 = vmatmul.mubr.f32.gmra.mrb[0].mxu0 %v1946
        %v2019 = vpop.f32.mrb[0].mxu0
        %v2020 = vadd.f32 0.0, %v2019
        %v2021 = vpop.f32.mrb[0].mxu0
        %2022 = vdwg.mxu0
        %v2023 = vmul.f32 %v2015, 0.5
        %v2024 = vmul.f32 %v2020, 0.5
        %v2025 = vmul.f32 %v2015, 0.044715
        %v2026 = vmul.f32 %v2020, 0.044715
        %v2027 = vmul.f32 %v2025, %v2015
        %v2028 = vmul.f32 %v2026, %v2020
        %v2029 = vmul.f32 %v2027, %v2015
        %v2030 = vmul.f32 %v2028, %v2020
        %v2031 = vadd.f32 %v2015, %v2029
        %v2032 = vadd.f32 %v2020, %v2030
        %v2033 = vmul.f32 %v2031, 0.7978846
        %v2034 = vmul.f32 %v2032, 0.7978846
        %v2035 = vtanh.pop %v2033
        %v2036 = vtanh.pop %v2034
        %v2037 = vadd.f32 %v2035, 1.0
        %v2038 = vadd.f32 %v2036, 1.0
        %v2039 = vmul.f32 %v2023, %v2037
        %v2040 = vmul.f32 %v2024, %v2038
        %2043 = vrot.lane.b32.xlu0 %v2015, 64
        %v2044 = vpop.permute.xlu0 %2043
        %2045 = vrot.lane.b32.xlu0 %v2020, 64
        %v2046 = vpop.permute.xlu0 %2045
        %v2049 = vmul.f32 %v2039, %v2044
        %v2050 = vmul.f32 %v2040, %v2046
        %v2051 = vld [vmem:[%s406] sm:$0xff]
        %v2052 = vld [vmem:[%s406 + $0x8] sm:$0xff]
        %v2053 = vld [vmem:[%s406 + $0x10] sm:$0xff]
        %v2054 = vld [vmem:[%s406 + $0x18] sm:$0xff]
        %v2055 = vld [vmem:[%s406 + $0x20] sm:$0xff]
        %v2056 = vld [vmem:[%s406 + $0x28] sm:$0xff]
        %v2057 = vld [vmem:[%s406 + $0x30] sm:$0xff]
        %v2058 = vld [vmem:[%s406 + $0x38] sm:$0xff]
        %vm2059 = vcmask 523264
        %v2061 = vsel %vm2059, %v2049, 0
        %v2064 = vsel %vm2059, %v2050, 0
        %2066 = vmatprep.subr.mxu0 0.0
        %2067 = vmatpush1.msra.mxu0 %v2051
        %2068 = vmatprep.subr.mxu0 0.0
        %2069 = vmatpush1.msra.mxu0 %v2052
        %2070 = vmatprep.subr.mxu0 0.0
        %2071 = vmatpush1.msra.mxu0 %v2053
        %2072 = vmatprep.subr.mxu0 0.0
        %2073 = vmatpush1.msra.mxu0 %v2054
        %2074 = vmatprep.subr.mxu0 0.0
        %2075 = vmatpush1.msra.mxu0 %v2055
        %2076 = vmatprep.subr.mxu0 0.0
        %2077 = vmatpush1.msra.mxu0 %v2056
        %2078 = vmatprep.subr.mxu0 0.0
        %2079 = vmatpush1.msra.mxu0 %v2057
        %2080 = vmatprep.subr.mxu0 0.0
        %2081 = vmatpush1.msra.mxu0 %v2058
        %2082 = vmatprep.subr.mxu0 0.0
        %2083 = vmatpush1.msra.mxu0 0.0
        %2084 = vmatprep.subr.mxu0 0.0
        %2085 = vmatpush1.msra.mxu0 0.0
        %2086 = vmatprep.subr.mxu0 0.0
        %2087 = vmatpush1.msra.mxu0 0.0
        %2088 = vmatprep.subr.mxu0 0.0
        %2089 = vmatpush1.msra.mxu0 0.0
        %2090 = vmatprep.subr.mxu0 0.0
        %2091 = vmatpush1.msra.mxu0 0.0
        %2092 = vmatprep.subr.mxu0 0.0
        %2093 = vmatpush1.msra.mxu0 0.0
        %2094 = vmatprep.subr.mxu0 0.0
        %2095 = vmatpush1.msra.mxu0 0.0
        %2096 = vmatprep.subr.mxu0 0.0
        %2097 = vmatpush1.msra.mxu0 0.0
        %2098 = vmatprep.subr.mxu0 0.0
        %2099 = vmatpush1.msra.mxu0 0.0
        %2100 = vmatprep.subr.mxu0 0.0
        %2101 = vmatpush1.msra.mxu0 0.0
        %2102 = vmatprep.subr.mxu0 0.0
        %2103 = vmatpush1.msra.mxu0 0.0
        %2104 = vmatprep.subr.mxu0 0.0
        %2105 = vmatpush1.msra.mxu0 0.0
        %2106 = vmatprep.subr.mxu0 0.0
        %2107 = vmatpush1.msra.mxu0 0.0
        %2108 = vmatprep.subr.mxu0 0.0
        %2109 = vmatpush1.msra.mxu0 0.0
        %2110 = vmatprep.subr.mxu0 0.0
        %2111 = vmatpush1.msra.mxu0 0.0
        %2112 = vmatprep.subr.mxu0 0.0
        %2113 = vmatpush1.msra.mxu0 0.0
        %2114 = vmatprep.subr.mxu0 0.0
        %2115 = vmatpush1.msra.mxu0 0.0
        %2116 = vmatprep.subr.mxu0 0.0
        %2117 = vmatpush1.msra.mxu0 0.0
        %2118 = vmatprep.subr.mxu0 0.0
        %2119 = vmatpush1.msra.mxu0 0.0
        %2120 = vmatprep.subr.mxu0 0.0
        %2121 = vmatpush1.msra.mxu0 0.0
        %2122 = vmatprep.subr.mxu0 0.0
        %2123 = vmatpush1.msra.mxu0 0.0
        %2124 = vmatprep.subr.mxu0 0.0
        %2125 = vmatpush1.msra.mxu0 0.0
        %2126 = vmatprep.subr.mxu0 0.0
        %2127 = vmatpush1.msra.mxu0 0.0
        %2128 = vmatprep.subr.mxu0 0.0
        %2129 = vmatpush1.msra.mxu0 0.0
        %2130 = vmatprep.mubr.f32.mxu0 0.0
        %2131 = vmatmul.mubr.f32.gmra.mrb[0].mxu0 %v2061
        %v2132 = vpop.f32.mrb[0].mxu0
        %v2133 = vadd.f32 0.0, %v2132
        %v2134 = vpop.f32.mrb[0].mxu0
        %2135 = vmatprep.mubr.f32.mxu0 0.0
        %2136 = vmatmul.mubr.f32.gmra.mrb[0].mxu0 %v2064
        %v2137 = vpop.f32.mrb[0].mxu0
        %v2138 = vadd.f32 0.0, %v2137
        %v2139 = vpop.f32.mrb[0].mxu0
        %2140 = vdwg.mxu0
        %v2141 = vadd.f32 %v1911, %v2133
        %v2142 = vadd.f32 %v1912, %v2138
        %2143 = vst.msk [vmem:[#allocation2] sm:$0xff] %vm421, %v2141
        %2144 = vst.msk [vmem:[#allocation2 + $0x8] sm:$0xff] %vm421, %v2142
        %p2145 = scmp.eq.s32.totalorder %s21, 1
        // Predicated region
        $region61: #{tpu_custom_call.1} parent=55 // pred_check
          %p2146 = pneg %p2145
        $region62: #{tpu_custom_call.1} parent=55 // pred_check_branch
          %2148 = sbr.rel (%p2146) target = $region64
        $region63: #{tpu_custom_call.1} parent=55 // pred_region
          %v2149 = vld [vmem:[%s8] sm:$0x1]
          %v2150 = vmul.f32 %v2141, %v2141
          %v2151 = vmul.f32 %v2142, %v2142
          %v2152 = vsel %vm421, %v2150, 0.0
          %2153 = vadd.xlane.f32.xlu0 %v2152
          %v2154 = vpop.xlane.xlu0 %2153
          %v2155 = vsel %vm421, %v2151, 0.0
          %2156 = vadd.xlane.f32.xlu0 %v2155
          %v2157 = vpop.xlane.xlu0 %2156
          %v2158 = vmul.f32 %v2154, %v428
          %v2159 = vmul.f32 %v2157, %v428
          %v2160 = vadd.f32 %v2158, 1e-06
          %v2161 = vadd.f32 %v2159, 1e-06
          %v2162 = vrsqrt.pop %v2160
          %v2163 = vrsqrt.pop %v2161
          %v2164 = vmul.f32 %v2141, %v2162
          %v2165 = vmul.f32 %v2142, %v2163
          %v2167 = vlaneseq
          %v2168 = vshrl.u32 %v2167, 7
          %v2169 = vsub.s32 0, %v2168
          %v2170 = vrot.slane %v2149, %v2169
          %v2172 = vmul.f32 %v2164, %v2170
          %v2173 = vmul.f32 %v2165, %v2170
          %2174 = vst.msk [vmem:[#allocation3] sm:$0xff] %vm421, %v2172
          %2175 = vst.msk [vmem:[#allocation3 + $0x8] sm:$0xff] %vm421, %v2173
        $region64: #{tpu_custom_call.1} parent=55 // pred_fallthru
          _
        // Predicated region
        $region65: #{tpu_custom_call.1} parent=55 // pred_check
          %p2176 = pneg %p253
        $region66: #{tpu_custom_call.1} parent=55 // pred_check_branch
          %2178 = sbr.rel (%p2176) target = $region68
        $region67: #{tpu_custom_call.1} parent=55 // pred_region
          %s2180 = ssub.s32 256, 256
          %2181 = vsyncadd [#allocation4], %s2180
          %s2182 = sshll.u32 [#allocation3], 4
          %s2183 = int_to_ptr.vmem [resolvable:$true] %s2182
          %2188 = dma.vmem_to_hbm [thread:$0]  %s2183, 256, %s9, [#allocation4], 128, 128, 8
        $region68: #{tpu_custom_call.1} parent=55 // pred_fallthru
          _
        // Predicated region
        $region69: #{tpu_custom_call.1} parent=55 // pred_check
          %p2189 = pneg %p253
        $region70: #{tpu_custom_call.1} parent=55 // pred_check_branch
          %2191 = sbr.rel (%p2189) target = $region72
        $region71: #{tpu_custom_call.1} parent=55 // pred_region
          %2192 = dma.done [#allocation4], 256
        $region72: #{tpu_custom_call.1} parent=55 // pred_fallthru
          _
      $region56: #{tpu_custom_call.1} parent=5 // pred_fallthru
        _
      %p2193 = scmp.le.s32.totalorder 2, %s16
      // Predicated region
      $region73: #{tpu_custom_call.1} parent=5 // pred_check
        %p2194 = pneg %p2193
      $region74: #{tpu_custom_call.1} parent=5 // pred_check_branch
        %2196 = sbr.rel (%p2194) target = $region76
      $region75: #{tpu_custom_call.1} parent=5 // pred_region
        %s2197 = ssub.s32 %s16, 2
      $region76: #{tpu_custom_call.1} parent=5 // pred_fallthru
        _
    $region6: #{tpu_custom_call.1} parent=1 // loop_footer
      %s20 = sadd.s32 1, %s16
    $region7: #{tpu_custom_call.1} parent=1 // loop_footer_branch
      %15 = sbr.rel target = $region3
    $region8: #{tpu_custom_call.1} parent=1 // loop_exit
      _
    %2198 = vsyncpa [#allocation4], 1
    %s2199 = scalar_lea.sflag [#allocation4], 1
    %2200 = vsyncpa %s2199, 1

</llo_original>
